<compile_context>
chip_gen: v7x
topology: tpu7x:2x2x1
jax: 0.10.0
libtpu: 0.0.40
codegen_flags: <defaults>
</compile_context>

<pallas_src>
import functools

import jax
import jax.numpy as jnp
from jax.experimental import pallas as pl
from jax.experimental.pallas import tpu as pltpu


def _lstm_kernel(x_ref, w0_ref, b0_ref, wr0_ref, w1_ref, b1_ref,
                 out_ref, xg_ref, *, seq_len, batch_pad, hidden_dim):
    """Single invocation: whole LSTM recurrence in one kernel body.

    x_ref : (T*Bp, I)        flattened, batch-padded input (f32 or bf16)
    w0_ref: (I, 4H)          layer-0 input weights   (gate order [i,f,o,g])
    b0_ref: (1, 4H)          layer-0 combined bias, f32
    wr0_ref:(H, 4H)          layer-0 recurrent weights
    w1_ref: (2H, 4H)         layer-1 fused [Wih1^T ; Whh1^T]
    b1_ref: (1, 4H)          layer-1 combined bias, f32
    out_ref:(Bp, H)          last-step hidden state of the top layer, f32
    xg_ref: (T*Bp, 4H) f32   scratch holding the hoisted input projection
    """
    T, Bp, H = seq_len, batch_pad, hidden_dim
    f32 = jnp.float32
    cdt = w1_ref.dtype  # matmul operand dtype (f32 or bf16)

    # ---- hoisted layer-0 input projection for all time steps at once ----
    xg_ref[...] = (jnp.dot(x_ref[...], w0_ref[...], preferred_element_type=f32)
                   + b0_ref[...])

    # Load weights once; hoist the layer-1 bias broadcast out of the loop.
    wr0 = wr0_ref[...]
    w1 = w1_ref[...]
    b1 = jnp.broadcast_to(b1_ref[...], (Bp, 4 * H))

    def gates_to_hc(gates, c):
        # Packed gate order [i, f, o, g]: one sigmoid slab, one tanh slab.
        sg = jax.nn.sigmoid(gates[:, :3 * H])
        g = jnp.tanh(gates[:, 3 * H:])
        i, f, o = sg[:, :H], sg[:, H:2 * H], sg[:, 2 * H:]
        c_new = f * c + i * g
        h_new = o * jnp.tanh(c_new)
        return h_new, c_new

    def step(t, carry):
        h1, c1, h2, c2 = carry
        row = pl.multiple_of(t * Bp, Bp)
        xg_t = xg_ref[pl.ds(row, Bp), :]                        # (Bp, 4H) f32

        # Layer 0: only the recurrent matmul remains on the serial path.
        g0 = xg_t + jnp.dot(h1.astype(cdt), wr0, preferred_element_type=f32)
        h1, c1 = gates_to_hc(g0, c1)

        # Layer 1: single fused matmul over concat([h1, h2]), K = 2H = 128.
        hcat = jnp.concatenate([h1, h2], axis=1).astype(cdt)    # (Bp, 2H)
        g1 = jnp.dot(hcat, w1, preferred_element_type=f32) + b1
        h2, c2 = gates_to_hc(g1, c2)
        return h1, c1, h2, c2

    z = jnp.zeros((Bp, H), f32)
    _, _, h2, _ = jax.lax.fori_loop(0, T, step, (z, z, z, z), unroll=True)
    out_ref[...] = h2


def torque_lstm_forward(x, params, *, hidden_dim, param_dtype=jnp.float32):
    """x: (T, B, joints*2) float32 -> (B, 1) float32."""
    T, B, I = x.shape
    H = hidden_dim
    wih0, whh0, b0, wih1, whh1, b1, wlin, blin = params

    Bp = ((B + 7) // 8) * 8  # pad batch to full sublanes

    def reorder(w):
        # PyTorch packs gate blocks as [i, f, g, o]; repack to [i, f, o, g]
        # so the kernel applies sigmoid / tanh each to one contiguous slab.
        return jnp.concatenate(
            [w[..., :2 * H], w[..., 3 * H:], w[..., 2 * H:3 * H]], axis=-1)

    w0 = reorder(wih0).astype(param_dtype)                     # (I, 4H)
    wr0 = reorder(whh0).astype(param_dtype)                    # (H, 4H)
    w1 = jnp.concatenate([reorder(wih1), reorder(whh1)],
                         axis=0).astype(param_dtype)           # (2H, 4H)
    b0r = reorder(b0).astype(jnp.float32)                      # (1, 4H)
    b1r = reorder(b1).astype(jnp.float32)                      # (1, 4H)

    xp = x if Bp == B else jnp.pad(x, ((0, 0), (0, Bp - B), (0, 0)))
    x2 = xp.reshape(T * Bp, I).astype(param_dtype)             # (T*Bp, I)

    kernel = functools.partial(_lstm_kernel, seq_len=T, batch_pad=Bp,
                               hidden_dim=H)

    vmem_spec = pl.BlockSpec(memory_space=pltpu.MemorySpace.VMEM)
    h2_last = pl.pallas_call(
        kernel,
        out_shape=jax.ShapeDtypeStruct((Bp, H), jnp.float32),
        in_specs=[vmem_spec] * 6,
        out_specs=vmem_spec,
        scratch_shapes=[pltpu.VMEM((T * Bp, 4 * H), jnp.float32)],
    )(x2, w0, b0r, wr0, w1, b1r)

    # Lane-dense kernel output; the tiny (H, 1) head, bias and padded-row
    # drop happen in plain JAX.
    return h2_last[:B] @ wlin + blin


def _reference_forward(x, params, *, hidden_dim):
    """Plain-JAX reference mirroring nn.LSTM + Linear, for verification."""
    (wih0, whh0, b0, wih1, whh1, b1, wlin, blin) = params
    H = hidden_dim
    B = x.shape[1]

    def cell(x_t, h, c, wih, whh, b):
        g = x_t @ wih + h @ whh + b
        i = jax.nn.sigmoid(g[:, :H])
        f = jax.nn.sigmoid(g[:, H:2 * H])
        gg = jnp.tanh(g[:, 2 * H:3 * H])
        o = jax.nn.sigmoid(g[:, 3 * H:])
        c_new = f * c + i * gg
        return o * jnp.tanh(c_new), c_new

    def step(carry, x_t):
        h1, c1, h2, c2 = carry
        h1, c1 = cell(x_t, h1, c1, wih0, whh0, b0)
        h2, c2 = cell(h1, h2, c2, wih1, whh1, b1)
        return (h1, c1, h2, c2), None

    z = jnp.zeros((B, H), jnp.float32)
    (h1, c1, h2, c2), _ = jax.lax.scan(step, (z, z, z, z), x)
    return h2 @ wlin + blin


def init_params(key, joints, hidden_dim):
    """Deterministic init, same shapes as nn.LSTM/nn.Linear parameters.

    Weights are returned pre-transposed and biases pre-summed, in the
    standard PyTorch gate order [i, f, g, o]:
      wihL: (in, 4H), whhL: (H, 4H), bL: (1, 4H), wlin: (H, 1), blin: (1, 1)
    """
    I = joints * 2
    H = hidden_dim
    bound = 1.0 / jnp.sqrt(H)
    keys = jax.random.split(key, 10)
    u = lambda k, shape: jax.random.uniform(k, shape, jnp.float32, -bound, bound)
    wih0 = u(keys[0], (I, 4 * H))
    whh0 = u(keys[1], (H, 4 * H))
    b0 = (u(keys[2], (1, 4 * H)) + u(keys[3], (1, 4 * H)))  # b_ih + b_hh
    wih1 = u(keys[4], (H, 4 * H))
    whh1 = u(keys[5], (H, 4 * H))
    b1 = (u(keys[6], (1, 4 * H)) + u(keys[7], (1, 4 * H)))
    wlin = u(keys[8], (H, 1))
    blin = u(keys[9], (1, 1))
    return (wih0, whh0, b0, wih1, whh1, b1, wlin, blin)


if __name__ == "__main__":
    joints = 6
    hidden_dim = 64
    seq_len = 8
    batch = 2

    key = jax.random.PRNGKey(0)
    k_x, k_p = jax.random.split(key)
    # layout: (seq_len, batch, joints*2) — nn.LSTM default time-major layout.
    x = jax.random.normal(k_x, (seq_len, batch, joints * 2), jnp.float32)
    params = init_params(k_p, joints, hidden_dim)

    ref = _reference_forward(x, params, hidden_dim=hidden_dim)

    # f32 path (exact vs. the f32 reference).
    out = torque_lstm_forward(x, params, hidden_dim=hidden_dim)
    out = jax.block_until_ready(out)
    assert out.shape == (batch, 1)
    assert jnp.allclose(out, ref, atol=1e-5, rtol=1e-5), (out, ref)

    # bf16-weight path (MXU-native on v6e/v7x); state & gate math stay f32,
    # so tolerance is only loosened by the bf16 operand rounding.
    out_bf16 = torque_lstm_forward(x, params, hidden_dim=hidden_dim,
                                   param_dtype=jnp.bfloat16)
    out_bf16 = jax.block_until_ready(out_bf16)
    assert out_bf16.shape == (batch, 1)
    assert jnp.allclose(out_bf16, ref, atol=1e-1), (out_bf16, ref)

    print("KERNEL_OK")
</pallas_src>

<mosaic_0001>
module attributes {stable_mosaic.version = 11 : i64} {
  func.func @_lstm_kernel(%arg0: memref<64x12xf32, #tpu.memory_space<vmem>>, %arg1: memref<12x256xf32, #tpu.memory_space<vmem>>, %arg2: memref<1x256xf32, #tpu.memory_space<vmem>>, %arg3: memref<64x256xf32, #tpu.memory_space<vmem>>, %arg4: memref<128x256xf32, #tpu.memory_space<vmem>>, %arg5: memref<1x256xf32, #tpu.memory_space<vmem>>, %arg6: memref<8x64xf32, #tpu.memory_space<vmem>>, %arg7: memref<64x256xf32, #tpu.memory_space<vmem>>) attributes {dimension_semantics = [], scalar_prefetch = 0 : i64, scratch_operands = 1 : i64, tpu.core_type = #tpu.core_type<tc>} {
    %c0 = arith.constant 0 : index
    %c0_0 = arith.constant 0 : index
    %0 = vector.load %arg0[%c0, %c0_0] : memref<64x12xf32, #tpu.memory_space<vmem>>, vector<64x12xf32>
    %c0_1 = arith.constant 0 : index
    %c0_2 = arith.constant 0 : index
    %1 = vector.load %arg1[%c0_1, %c0_2] : memref<12x256xf32, #tpu.memory_space<vmem>>, vector<12x256xf32>
    %cst = arith.constant dense<0.000000e+00> : vector<64x256xf32>
    %2 = tpu.matmul %0, %1, %cst {dimension_numbers = #tpu.dot_dimension_numbers<[1], [0], [0], [1], [0, 0, 1, 1], [], []>} : vector<64x12xf32>, vector<12x256xf32>, vector<64x256xf32> -> vector<64x256xf32>
    %c0_3 = arith.constant 0 : index
    %c0_4 = arith.constant 0 : index
    %3 = vector.load %arg2[%c0_3, %c0_4] : memref<1x256xf32, #tpu.memory_space<vmem>>, vector<1x256xf32>
    %4 = vector.broadcast %3 : vector<1x256xf32> to vector<64x256xf32>
    %5 = arith.addf %2, %4 : vector<64x256xf32>
    %c0_5 = arith.constant 0 : index
    %c0_6 = arith.constant 0 : index
    %6 = vector.load %arg7[%c0_5, %c0_6] : memref<64x256xf32, #tpu.memory_space<vmem>>, vector<64x256xf32>
    tpu.vector_store %arg7[%c0_5, %c0_6], %5 {strides = array<i32>} : memref<64x256xf32, #tpu.memory_space<vmem>>, vector<64x256xf32>,
    %c0_7 = arith.constant 0 : index
    %c0_8 = arith.constant 0 : index
    %7 = vector.load %arg3[%c0_7, %c0_8] : memref<64x256xf32, #tpu.memory_space<vmem>>, vector<64x256xf32>
    %c0_9 = arith.constant 0 : index
    %c0_10 = arith.constant 0 : index
    %8 = vector.load %arg4[%c0_9, %c0_10] : memref<128x256xf32, #tpu.memory_space<vmem>>, vector<128x256xf32>
    %c0_11 = arith.constant 0 : index
    %c0_12 = arith.constant 0 : index
    %9 = vector.load %arg5[%c0_11, %c0_12] : memref<1x256xf32, #tpu.memory_space<vmem>>, vector<1x256xf32>
    %10 = vector.shape_cast %9 : vector<1x256xf32> to vector<1x256xf32>
    %11 = vector.broadcast %10 : vector<1x256xf32> to vector<8x256xf32>
    %cst_13 = arith.constant 0.000000e+00 : f32
    %12 = vector.broadcast %cst_13 : f32 to vector<8x64xf32>
    %c0_i32 = arith.constant 0 : i32
    %c8_i32 = arith.constant 8 : i32
    %13 = arith.muli %c0_i32, %c8_i32 : i32
    %14 = tpu.assume_multiple %13, 8 : i32
    %15 = arith.index_cast %14 : i32 to index
    %c0_14 = arith.constant 0 : index
    %16 = vector.load %arg7[%15, %c0_14] : memref<64x256xf32, #tpu.memory_space<vmem>>, vector<8x256xf32>
    %cst_15 = arith.constant dense<0.000000e+00> : vector<8x256xf32>
    %17 = tpu.matmul %12, %7, %cst_15 {dimension_numbers = #tpu.dot_dimension_numbers<[1], [0], [0], [1], [0, 0, 1, 1], [], []>} : vector<8x64xf32>, vector<64x256xf32>, vector<8x256xf32> -> vector<8x256xf32>
    %18 = arith.addf %16, %17 : vector<8x256xf32>
    %19 = vector.extract_strided_slice %18 {offsets = [0, 0], sizes = [8, 192], strides = [1, 1]} : vector<8x256xf32> to vector<8x192xf32>
    %20 = arith.negf %19 : vector<8x192xf32>
    %21 = math.exp %20 : vector<8x192xf32>
    %cst_16 = arith.constant 1.000000e+00 : f32
    %22 = vector.broadcast %cst_16 : f32 to vector<8x192xf32>
    %23 = arith.addf %22, %21 : vector<8x192xf32>
    %24 = arith.divf %22, %23 : vector<8x192xf32>
    %25 = vector.extract_strided_slice %18 {offsets = [0, 192], sizes = [8, 64], strides = [1, 1]} : vector<8x256xf32> to vector<8x64xf32>
    %26 = math.tanh %25 : vector<8x64xf32>
    %27 = vector.extract_strided_slice %24 {offsets = [0, 0], sizes = [8, 64], strides = [1, 1]} : vector<8x192xf32> to vector<8x64xf32>
    %28 = vector.extract_strided_slice %24 {offsets = [0, 64], sizes = [8, 64], strides = [1, 1]} : vector<8x192xf32> to vector<8x64xf32>
    %29 = vector.extract_strided_slice %24 {offsets = [0, 128], sizes = [8, 64], strides = [1, 1]} : vector<8x192xf32> to vector<8x64xf32>
    %30 = arith.mulf %28, %12 : vector<8x64xf32>
    %31 = arith.mulf %27, %26 : vector<8x64xf32>
    %32 = arith.addf %30, %31 : vector<8x64xf32>
    %33 = math.tanh %32 : vector<8x64xf32>
    %34 = arith.mulf %29, %33 : vector<8x64xf32>
    %35 = tpu.concatenate %34, %12 in 1 : vector<8x64xf32>, vector<8x64xf32> -> vector<8x128xf32>
    %cst_17 = arith.constant dense<0.000000e+00> : vector<8x256xf32>
    %36 = tpu.matmul %35, %8, %cst_17 {dimension_numbers = #tpu.dot_dimension_numbers<[1], [0], [0], [1], [0, 0, 1, 1], [], []>} : vector<8x128xf32>, vector<128x256xf32>, vector<8x256xf32> -> vector<8x256xf32>
    %37 = arith.addf %36, %11 : vector<8x256xf32>
    %38 = vector.extract_strided_slice %37 {offsets = [0, 0], sizes = [8, 192], strides = [1, 1]} : vector<8x256xf32> to vector<8x192xf32>
    %39 = arith.negf %38 : vector<8x192xf32>
    %40 = math.exp %39 : vector<8x192xf32>
    %cst_18 = arith.constant 1.000000e+00 : f32
    %41 = vector.broadcast %cst_18 : f32 to vector<8x192xf32>
    %42 = arith.addf %41, %40 : vector<8x192xf32>
    %43 = arith.divf %41, %42 : vector<8x192xf32>
    %44 = vector.extract_strided_slice %37 {offsets = [0, 192], sizes = [8, 64], strides = [1, 1]} : vector<8x256xf32> to vector<8x64xf32>
    %45 = math.tanh %44 : vector<8x64xf32>
    %46 = vector.extract_strided_slice %43 {offsets = [0, 0], sizes = [8, 64], strides = [1, 1]} : vector<8x192xf32> to vector<8x64xf32>
    %47 = vector.extract_strided_slice %43 {offsets = [0, 64], sizes = [8, 64], strides = [1, 1]} : vector<8x192xf32> to vector<8x64xf32>
    %48 = vector.extract_strided_slice %43 {offsets = [0, 128], sizes = [8, 64], strides = [1, 1]} : vector<8x192xf32> to vector<8x64xf32>
    %49 = arith.mulf %47, %12 : vector<8x64xf32>
    %50 = arith.mulf %46, %45 : vector<8x64xf32>
    %51 = arith.addf %49, %50 : vector<8x64xf32>
    %52 = math.tanh %51 : vector<8x64xf32>
    %53 = arith.mulf %48, %52 : vector<8x64xf32>
    %c1_i32 = arith.constant 1 : i32
    %c8_i32_19 = arith.constant 8 : i32
    %54 = arith.muli %c1_i32, %c8_i32_19 : i32
    %55 = tpu.assume_multiple %54, 8 : i32
    %56 = arith.index_cast %55 : i32 to index
    %c0_20 = arith.constant 0 : index
    %57 = vector.load %arg7[%56, %c0_20] : memref<64x256xf32, #tpu.memory_space<vmem>>, vector<8x256xf32>
    %cst_21 = arith.constant dense<0.000000e+00> : vector<8x256xf32>
    %58 = tpu.matmul %34, %7, %cst_21 {dimension_numbers = #tpu.dot_dimension_numbers<[1], [0], [0], [1], [0, 0, 1, 1], [], []>} : vector<8x64xf32>, vector<64x256xf32>, vector<8x256xf32> -> vector<8x256xf32>
    %59 = arith.addf %57, %58 : vector<8x256xf32>
    %60 = vector.extract_strided_slice %59 {offsets = [0, 0], sizes = [8, 192], strides = [1, 1]} : vector<8x256xf32> to vector<8x192xf32>
    %61 = arith.negf %60 : vector<8x192xf32>
    %62 = math.exp %61 : vector<8x192xf32>
    %cst_22 = arith.constant 1.000000e+00 : f32
    %63 = vector.broadcast %cst_22 : f32 to vector<8x192xf32>
    %64 = arith.addf %63, %62 : vector<8x192xf32>
    %65 = arith.divf %63, %64 : vector<8x192xf32>
    %66 = vector.extract_strided_slice %59 {offsets = [0, 192], sizes = [8, 64], strides = [1, 1]} : vector<8x256xf32> to vector<8x64xf32>
    %67 = math.tanh %66 : vector<8x64xf32>
    %68 = vector.extract_strided_slice %65 {offsets = [0, 0], sizes = [8, 64], strides = [1, 1]} : vector<8x192xf32> to vector<8x64xf32>
    %69 = vector.extract_strided_slice %65 {offsets = [0, 64], sizes = [8, 64], strides = [1, 1]} : vector<8x192xf32> to vector<8x64xf32>
    %70 = vector.extract_strided_slice %65 {offsets = [0, 128], sizes = [8, 64], strides = [1, 1]} : vector<8x192xf32> to vector<8x64xf32>
    %71 = arith.mulf %69, %32 : vector<8x64xf32>
    %72 = arith.mulf %68, %67 : vector<8x64xf32>
    %73 = arith.addf %71, %72 : vector<8x64xf32>
    %74 = math.tanh %73 : vector<8x64xf32>
    %75 = arith.mulf %70, %74 : vector<8x64xf32>
    %76 = tpu.concatenate %75, %53 in 1 : vector<8x64xf32>, vector<8x64xf32> -> vector<8x128xf32>
    %cst_23 = arith.constant dense<0.000000e+00> : vector<8x256xf32>
    %77 = tpu.matmul %76, %8, %cst_23 {dimension_numbers = #tpu.dot_dimension_numbers<[1], [0], [0], [1], [0, 0, 1, 1], [], []>} : vector<8x128xf32>, vector<128x256xf32>, vector<8x256xf32> -> vector<8x256xf32>
    %78 = arith.addf %77, %11 : vector<8x256xf32>
    %79 = vector.extract_strided_slice %78 {offsets = [0, 0], sizes = [8, 192], strides = [1, 1]} : vector<8x256xf32> to vector<8x192xf32>
    %80 = arith.negf %79 : vector<8x192xf32>
    %81 = math.exp %80 : vector<8x192xf32>
    %cst_24 = arith.constant 1.000000e+00 : f32
    %82 = vector.broadcast %cst_24 : f32 to vector<8x192xf32>
    %83 = arith.addf %82, %81 : vector<8x192xf32>
    %84 = arith.divf %82, %83 : vector<8x192xf32>
    %85 = vector.extract_strided_slice %78 {offsets = [0, 192], sizes = [8, 64], strides = [1, 1]} : vector<8x256xf32> to vector<8x64xf32>
    %86 = math.tanh %85 : vector<8x64xf32>
    %87 = vector.extract_strided_slice %84 {offsets = [0, 0], sizes = [8, 64], strides = [1, 1]} : vector<8x192xf32> to vector<8x64xf32>
    %88 = vector.extract_strided_slice %84 {offsets = [0, 64], sizes = [8, 64], strides = [1, 1]} : vector<8x192xf32> to vector<8x64xf32>
    %89 = vector.extract_strided_slice %84 {offsets = [0, 128], sizes = [8, 64], strides = [1, 1]} : vector<8x192xf32> to vector<8x64xf32>
    %90 = arith.mulf %88, %51 : vector<8x64xf32>
    %91 = arith.mulf %87, %86 : vector<8x64xf32>
    %92 = arith.addf %90, %91 : vector<8x64xf32>
    %93 = math.tanh %92 : vector<8x64xf32>
    %94 = arith.mulf %89, %93 : vector<8x64xf32>
    %c2_i32 = arith.constant 2 : i32
    %c8_i32_25 = arith.constant 8 : i32
    %95 = arith.muli %c2_i32, %c8_i32_25 : i32
    %96 = tpu.assume_multiple %95, 8 : i32
    %97 = arith.index_cast %96 : i32 to index
    %c0_26 = arith.constant 0 : index
    %98 = vector.load %arg7[%97, %c0_26] : memref<64x256xf32, #tpu.memory_space<vmem>>, vector<8x256xf32>
    %cst_27 = arith.constant dense<0.000000e+00> : vector<8x256xf32>
    %99 = tpu.matmul %75, %7, %cst_27 {dimension_numbers = #tpu.dot_dimension_numbers<[1], [0], [0], [1], [0, 0, 1, 1], [], []>} : vector<8x64xf32>, vector<64x256xf32>, vector<8x256xf32> -> vector<8x256xf32>
    %100 = arith.addf %98, %99 : vector<8x256xf32>
    %101 = vector.extract_strided_slice %100 {offsets = [0, 0], sizes = [8, 192], strides = [1, 1]} : vector<8x256xf32> to vector<8x192xf32>
    %102 = arith.negf %101 : vector<8x192xf32>
    %103 = math.exp %102 : vector<8x192xf32>
    %cst_28 = arith.constant 1.000000e+00 : f32
    %104 = vector.broadcast %cst_28 : f32 to vector<8x192xf32>
    %105 = arith.addf %104, %103 : vector<8x192xf32>
    %106 = arith.divf %104, %105 : vector<8x192xf32>
    %107 = vector.extract_strided_slice %100 {offsets = [0, 192], sizes = [8, 64], strides = [1, 1]} : vector<8x256xf32> to vector<8x64xf32>
    %108 = math.tanh %107 : vector<8x64xf32>
    %109 = vector.extract_strided_slice %106 {offsets = [0, 0], sizes = [8, 64], strides = [1, 1]} : vector<8x192xf32> to vector<8x64xf32>
    %110 = vector.extract_strided_slice %106 {offsets = [0, 64], sizes = [8, 64], strides = [1, 1]} : vector<8x192xf32> to vector<8x64xf32>
    %111 = vector.extract_strided_slice %106 {offsets = [0, 128], sizes = [8, 64], strides = [1, 1]} : vector<8x192xf32> to vector<8x64xf32>
    %112 = arith.mulf %110, %73 : vector<8x64xf32>
    %113 = arith.mulf %109, %108 : vector<8x64xf32>
    %114 = arith.addf %112, %113 : vector<8x64xf32>
    %115 = math.tanh %114 : vector<8x64xf32>
    %116 = arith.mulf %111, %115 : vector<8x64xf32>
    %117 = tpu.concatenate %116, %94 in 1 : vector<8x64xf32>, vector<8x64xf32> -> vector<8x128xf32>
    %cst_29 = arith.constant dense<0.000000e+00> : vector<8x256xf32>
    %118 = tpu.matmul %117, %8, %cst_29 {dimension_numbers = #tpu.dot_dimension_numbers<[1], [0], [0], [1], [0, 0, 1, 1], [], []>} : vector<8x128xf32>, vector<128x256xf32>, vector<8x256xf32> -> vector<8x256xf32>
    %119 = arith.addf %118, %11 : vector<8x256xf32>
    %120 = vector.extract_strided_slice %119 {offsets = [0, 0], sizes = [8, 192], strides = [1, 1]} : vector<8x256xf32> to vector<8x192xf32>
    %121 = arith.negf %120 : vector<8x192xf32>
    %122 = math.exp %121 : vector<8x192xf32>
    %cst_30 = arith.constant 1.000000e+00 : f32
    %123 = vector.broadcast %cst_30 : f32 to vector<8x192xf32>
    %124 = arith.addf %123, %122 : vector<8x192xf32>
    %125 = arith.divf %123, %124 : vector<8x192xf32>
    %126 = vector.extract_strided_slice %119 {offsets = [0, 192], sizes = [8, 64], strides = [1, 1]} : vector<8x256xf32> to vector<8x64xf32>
    %127 = math.tanh %126 : vector<8x64xf32>
    %128 = vector.extract_strided_slice %125 {offsets = [0, 0], sizes = [8, 64], strides = [1, 1]} : vector<8x192xf32> to vector<8x64xf32>
    %129 = vector.extract_strided_slice %125 {offsets = [0, 64], sizes = [8, 64], strides = [1, 1]} : vector<8x192xf32> to vector<8x64xf32>
    %130 = vector.extract_strided_slice %125 {offsets = [0, 128], sizes = [8, 64], strides = [1, 1]} : vector<8x192xf32> to vector<8x64xf32>
    %131 = arith.mulf %129, %92 : vector<8x64xf32>
    %132 = arith.mulf %128, %127 : vector<8x64xf32>
    %133 = arith.addf %131, %132 : vector<8x64xf32>
    %134 = math.tanh %133 : vector<8x64xf32>
    %135 = arith.mulf %130, %134 : vector<8x64xf32>
    %c3_i32 = arith.constant 3 : i32
    %c8_i32_31 = arith.constant 8 : i32
    %136 = arith.muli %c3_i32, %c8_i32_31 : i32
    %137 = tpu.assume_multiple %136, 8 : i32
    %138 = arith.index_cast %137 : i32 to index
    %c0_32 = arith.constant 0 : index
    %139 = vector.load %arg7[%138, %c0_32] : memref<64x256xf32, #tpu.memory_space<vmem>>, vector<8x256xf32>
    %cst_33 = arith.constant dense<0.000000e+00> : vector<8x256xf32>
    %140 = tpu.matmul %116, %7, %cst_33 {dimension_numbers = #tpu.dot_dimension_numbers<[1], [0], [0], [1], [0, 0, 1, 1], [], []>} : vector<8x64xf32>, vector<64x256xf32>, vector<8x256xf32> -> vector<8x256xf32>
    %141 = arith.addf %139, %140 : vector<8x256xf32>
    %142 = vector.extract_strided_slice %141 {offsets = [0, 0], sizes = [8, 192], strides = [1, 1]} : vector<8x256xf32> to vector<8x192xf32>
    %143 = arith.negf %142 : vector<8x192xf32>
    %144 = math.exp %143 : vector<8x192xf32>
    %cst_34 = arith.constant 1.000000e+00 : f32
    %145 = vector.broadcast %cst_34 : f32 to vector<8x192xf32>
    %146 = arith.addf %145, %144 : vector<8x192xf32>
    %147 = arith.divf %145, %146 : vector<8x192xf32>
    %148 = vector.extract_strided_slice %141 {offsets = [0, 192], sizes = [8, 64], strides = [1, 1]} : vector<8x256xf32> to vector<8x64xf32>
    %149 = math.tanh %148 : vector<8x64xf32>
    %150 = vector.extract_strided_slice %147 {offsets = [0, 0], sizes = [8, 64], strides = [1, 1]} : vector<8x192xf32> to vector<8x64xf32>
    %151 = vector.extract_strided_slice %147 {offsets = [0, 64], sizes = [8, 64], strides = [1, 1]} : vector<8x192xf32> to vector<8x64xf32>
    %152 = vector.extract_strided_slice %147 {offsets = [0, 128], sizes = [8, 64], strides = [1, 1]} : vector<8x192xf32> to vector<8x64xf32>
    %153 = arith.mulf %151, %114 : vector<8x64xf32>
    %154 = arith.mulf %150, %149 : vector<8x64xf32>
    %155 = arith.addf %153, %154 : vector<8x64xf32>
    %156 = math.tanh %155 : vector<8x64xf32>
    %157 = arith.mulf %152, %156 : vector<8x64xf32>
    %158 = tpu.concatenate %157, %135 in 1 : vector<8x64xf32>, vector<8x64xf32> -> vector<8x128xf32>
    %cst_35 = arith.constant dense<0.000000e+00> : vector<8x256xf32>
    %159 = tpu.matmul %158, %8, %cst_35 {dimension_numbers = #tpu.dot_dimension_numbers<[1], [0], [0], [1], [0, 0, 1, 1], [], []>} : vector<8x128xf32>, vector<128x256xf32>, vector<8x256xf32> -> vector<8x256xf32>
    %160 = arith.addf %159, %11 : vector<8x256xf32>
    %161 = vector.extract_strided_slice %160 {offsets = [0, 0], sizes = [8, 192], strides = [1, 1]} : vector<8x256xf32> to vector<8x192xf32>
    %162 = arith.negf %161 : vector<8x192xf32>
    %163 = math.exp %162 : vector<8x192xf32>
    %cst_36 = arith.constant 1.000000e+00 : f32
    %164 = vector.broadcast %cst_36 : f32 to vector<8x192xf32>
    %165 = arith.addf %164, %163 : vector<8x192xf32>
    %166 = arith.divf %164, %165 : vector<8x192xf32>
    %167 = vector.extract_strided_slice %160 {offsets = [0, 192], sizes = [8, 64], strides = [1, 1]} : vector<8x256xf32> to vector<8x64xf32>
    %168 = math.tanh %167 : vector<8x64xf32>
    %169 = vector.extract_strided_slice %166 {offsets = [0, 0], sizes = [8, 64], strides = [1, 1]} : vector<8x192xf32> to vector<8x64xf32>
    %170 = vector.extract_strided_slice %166 {offsets = [0, 64], sizes = [8, 64], strides = [1, 1]} : vector<8x192xf32> to vector<8x64xf32>
    %171 = vector.extract_strided_slice %166 {offsets = [0, 128], sizes = [8, 64], strides = [1, 1]} : vector<8x192xf32> to vector<8x64xf32>
    %172 = arith.mulf %170, %133 : vector<8x64xf32>
    %173 = arith.mulf %169, %168 : vector<8x64xf32>
    %174 = arith.addf %172, %173 : vector<8x64xf32>
    %175 = math.tanh %174 : vector<8x64xf32>
    %176 = arith.mulf %171, %175 : vector<8x64xf32>
    %c4_i32 = arith.constant 4 : i32
    %c8_i32_37 = arith.constant 8 : i32
    %177 = arith.muli %c4_i32, %c8_i32_37 : i32
    %178 = tpu.assume_multiple %177, 8 : i32
    %179 = arith.index_cast %178 : i32 to index
    %c0_38 = arith.constant 0 : index
    %180 = vector.load %arg7[%179, %c0_38] : memref<64x256xf32, #tpu.memory_space<vmem>>, vector<8x256xf32>
    %cst_39 = arith.constant dense<0.000000e+00> : vector<8x256xf32>
    %181 = tpu.matmul %157, %7, %cst_39 {dimension_numbers = #tpu.dot_dimension_numbers<[1], [0], [0], [1], [0, 0, 1, 1], [], []>} : vector<8x64xf32>, vector<64x256xf32>, vector<8x256xf32> -> vector<8x256xf32>
    %182 = arith.addf %180, %181 : vector<8x256xf32>
    %183 = vector.extract_strided_slice %182 {offsets = [0, 0], sizes = [8, 192], strides = [1, 1]} : vector<8x256xf32> to vector<8x192xf32>
    %184 = arith.negf %183 : vector<8x192xf32>
    %185 = math.exp %184 : vector<8x192xf32>
    %cst_40 = arith.constant 1.000000e+00 : f32
    %186 = vector.broadcast %cst_40 : f32 to vector<8x192xf32>
    %187 = arith.addf %186, %185 : vector<8x192xf32>
    %188 = arith.divf %186, %187 : vector<8x192xf32>
    %189 = vector.extract_strided_slice %182 {offsets = [0, 192], sizes = [8, 64], strides = [1, 1]} : vector<8x256xf32> to vector<8x64xf32>
    %190 = math.tanh %189 : vector<8x64xf32>
    %191 = vector.extract_strided_slice %188 {offsets = [0, 0], sizes = [8, 64], strides = [1, 1]} : vector<8x192xf32> to vector<8x64xf32>
    %192 = vector.extract_strided_slice %188 {offsets = [0, 64], sizes = [8, 64], strides = [1, 1]} : vector<8x192xf32> to vector<8x64xf32>
    %193 = vector.extract_strided_slice %188 {offsets = [0, 128], sizes = [8, 64], strides = [1, 1]} : vector<8x192xf32> to vector<8x64xf32>
    %194 = arith.mulf %192, %155 : vector<8x64xf32>
    %195 = arith.mulf %191, %190 : vector<8x64xf32>
    %196 = arith.addf %194, %195 : vector<8x64xf32>
    %197 = math.tanh %196 : vector<8x64xf32>
    %198 = arith.mulf %193, %197 : vector<8x64xf32>
    %199 = tpu.concatenate %198, %176 in 1 : vector<8x64xf32>, vector<8x64xf32> -> vector<8x128xf32>
    %cst_41 = arith.constant dense<0.000000e+00> : vector<8x256xf32>
    %200 = tpu.matmul %199, %8, %cst_41 {dimension_numbers = #tpu.dot_dimension_numbers<[1], [0], [0], [1], [0, 0, 1, 1], [], []>} : vector<8x128xf32>, vector<128x256xf32>, vector<8x256xf32> -> vector<8x256xf32>
    %201 = arith.addf %200, %11 : vector<8x256xf32>
    %202 = vector.extract_strided_slice %201 {offsets = [0, 0], sizes = [8, 192], strides = [1, 1]} : vector<8x256xf32> to vector<8x192xf32>
    %203 = arith.negf %202 : vector<8x192xf32>
    %204 = math.exp %203 : vector<8x192xf32>
    %cst_42 = arith.constant 1.000000e+00 : f32
    %205 = vector.broadcast %cst_42 : f32 to vector<8x192xf32>
    %206 = arith.addf %205, %204 : vector<8x192xf32>
    %207 = arith.divf %205, %206 : vector<8x192xf32>
    %208 = vector.extract_strided_slice %201 {offsets = [0, 192], sizes = [8, 64], strides = [1, 1]} : vector<8x256xf32> to vector<8x64xf32>
    %209 = math.tanh %208 : vector<8x64xf32>
    %210 = vector.extract_strided_slice %207 {offsets = [0, 0], sizes = [8, 64], strides = [1, 1]} : vector<8x192xf32> to vector<8x64xf32>
    %211 = vector.extract_strided_slice %207 {offsets = [0, 64], sizes = [8, 64], strides = [1, 1]} : vector<8x192xf32> to vector<8x64xf32>
    %212 = vector.extract_strided_slice %207 {offsets = [0, 128], sizes = [8, 64], strides = [1, 1]} : vector<8x192xf32> to vector<8x64xf32>
    %213 = arith.mulf %211, %174 : vector<8x64xf32>
    %214 = arith.mulf %210, %209 : vector<8x64xf32>
    %215 = arith.addf %213, %214 : vector<8x64xf32>
    %216 = math.tanh %215 : vector<8x64xf32>
    %217 = arith.mulf %212, %216 : vector<8x64xf32>
    %c5_i32 = arith.constant 5 : i32
    %c8_i32_43 = arith.constant 8 : i32
    %218 = arith.muli %c5_i32, %c8_i32_43 : i32
    %219 = tpu.assume_multiple %218, 8 : i32
    %220 = arith.index_cast %219 : i32 to index
    %c0_44 = arith.constant 0 : index
    %221 = vector.load %arg7[%220, %c0_44] : memref<64x256xf32, #tpu.memory_space<vmem>>, vector<8x256xf32>
    %cst_45 = arith.constant dense<0.000000e+00> : vector<8x256xf32>
    %222 = tpu.matmul %198, %7, %cst_45 {dimension_numbers = #tpu.dot_dimension_numbers<[1], [0], [0], [1], [0, 0, 1, 1], [], []>} : vector<8x64xf32>, vector<64x256xf32>, vector<8x256xf32> -> vector<8x256xf32>
    %223 = arith.addf %221, %222 : vector<8x256xf32>
    %224 = vector.extract_strided_slice %223 {offsets = [0, 0], sizes = [8, 192], strides = [1, 1]} : vector<8x256xf32> to vector<8x192xf32>
    %225 = arith.negf %224 : vector<8x192xf32>
    %226 = math.exp %225 : vector<8x192xf32>
    %cst_46 = arith.constant 1.000000e+00 : f32
    %227 = vector.broadcast %cst_46 : f32 to vector<8x192xf32>
    %228 = arith.addf %227, %226 : vector<8x192xf32>
    %229 = arith.divf %227, %228 : vector<8x192xf32>
    %230 = vector.extract_strided_slice %223 {offsets = [0, 192], sizes = [8, 64], strides = [1, 1]} : vector<8x256xf32> to vector<8x64xf32>
    %231 = math.tanh %230 : vector<8x64xf32>
    %232 = vector.extract_strided_slice %229 {offsets = [0, 0], sizes = [8, 64], strides = [1, 1]} : vector<8x192xf32> to vector<8x64xf32>
    %233 = vector.extract_strided_slice %229 {offsets = [0, 64], sizes = [8, 64], strides = [1, 1]} : vector<8x192xf32> to vector<8x64xf32>
    %234 = vector.extract_strided_slice %229 {offsets = [0, 128], sizes = [8, 64], strides = [1, 1]} : vector<8x192xf32> to vector<8x64xf32>
    %235 = arith.mulf %233, %196 : vector<8x64xf32>
    %236 = arith.mulf %232, %231 : vector<8x64xf32>
    %237 = arith.addf %235, %236 : vector<8x64xf32>
    %238 = math.tanh %237 : vector<8x64xf32>
    %239 = arith.mulf %234, %238 : vector<8x64xf32>
    %240 = tpu.concatenate %239, %217 in 1 : vector<8x64xf32>, vector<8x64xf32> -> vector<8x128xf32>
    %cst_47 = arith.constant dense<0.000000e+00> : vector<8x256xf32>
    %241 = tpu.matmul %240, %8, %cst_47 {dimension_numbers = #tpu.dot_dimension_numbers<[1], [0], [0], [1], [0, 0, 1, 1], [], []>} : vector<8x128xf32>, vector<128x256xf32>, vector<8x256xf32> -> vector<8x256xf32>
    %242 = arith.addf %241, %11 : vector<8x256xf32>
    %243 = vector.extract_strided_slice %242 {offsets = [0, 0], sizes = [8, 192], strides = [1, 1]} : vector<8x256xf32> to vector<8x192xf32>
    %244 = arith.negf %243 : vector<8x192xf32>
    %245 = math.exp %244 : vector<8x192xf32>
    %cst_48 = arith.constant 1.000000e+00 : f32
    %246 = vector.broadcast %cst_48 : f32 to vector<8x192xf32>
    %247 = arith.addf %246, %245 : vector<8x192xf32>
    %248 = arith.divf %246, %247 : vector<8x192xf32>
    %249 = vector.extract_strided_slice %242 {offsets = [0, 192], sizes = [8, 64], strides = [1, 1]} : vector<8x256xf32> to vector<8x64xf32>
    %250 = math.tanh %249 : vector<8x64xf32>
    %251 = vector.extract_strided_slice %248 {offsets = [0, 0], sizes = [8, 64], strides = [1, 1]} : vector<8x192xf32> to vector<8x64xf32>
    %252 = vector.extract_strided_slice %248 {offsets = [0, 64], sizes = [8, 64], strides = [1, 1]} : vector<8x192xf32> to vector<8x64xf32>
    %253 = vector.extract_strided_slice %248 {offsets = [0, 128], sizes = [8, 64], strides = [1, 1]} : vector<8x192xf32> to vector<8x64xf32>
    %254 = arith.mulf %252, %215 : vector<8x64xf32>
    %255 = arith.mulf %251, %250 : vector<8x64xf32>
    %256 = arith.addf %254, %255 : vector<8x64xf32>
    %257 = math.tanh %256 : vector<8x64xf32>
    %258 = arith.mulf %253, %257 : vector<8x64xf32>
    %c6_i32 = arith.constant 6 : i32
    %c8_i32_49 = arith.constant 8 : i32
    %259 = arith.muli %c6_i32, %c8_i32_49 : i32
    %260 = tpu.assume_multiple %259, 8 : i32
    %261 = arith.index_cast %260 : i32 to index
    %c0_50 = arith.constant 0 : index
    %262 = vector.load %arg7[%261, %c0_50] : memref<64x256xf32, #tpu.memory_space<vmem>>, vector<8x256xf32>
    %cst_51 = arith.constant dense<0.000000e+00> : vector<8x256xf32>
    %263 = tpu.matmul %239, %7, %cst_51 {dimension_numbers = #tpu.dot_dimension_numbers<[1], [0], [0], [1], [0, 0, 1, 1], [], []>} : vector<8x64xf32>, vector<64x256xf32>, vector<8x256xf32> -> vector<8x256xf32>
    %264 = arith.addf %262, %263 : vector<8x256xf32>
    %265 = vector.extract_strided_slice %264 {offsets = [0, 0], sizes = [8, 192], strides = [1, 1]} : vector<8x256xf32> to vector<8x192xf32>
    %266 = arith.negf %265 : vector<8x192xf32>
    %267 = math.exp %266 : vector<8x192xf32>
    %cst_52 = arith.constant 1.000000e+00 : f32
    %268 = vector.broadcast %cst_52 : f32 to vector<8x192xf32>
    %269 = arith.addf %268, %267 : vector<8x192xf32>
    %270 = arith.divf %268, %269 : vector<8x192xf32>
    %271 = vector.extract_strided_slice %264 {offsets = [0, 192], sizes = [8, 64], strides = [1, 1]} : vector<8x256xf32> to vector<8x64xf32>
    %272 = math.tanh %271 : vector<8x64xf32>
    %273 = vector.extract_strided_slice %270 {offsets = [0, 0], sizes = [8, 64], strides = [1, 1]} : vector<8x192xf32> to vector<8x64xf32>
    %274 = vector.extract_strided_slice %270 {offsets = [0, 64], sizes = [8, 64], strides = [1, 1]} : vector<8x192xf32> to vector<8x64xf32>
    %275 = vector.extract_strided_slice %270 {offsets = [0, 128], sizes = [8, 64], strides = [1, 1]} : vector<8x192xf32> to vector<8x64xf32>
    %276 = arith.mulf %274, %237 : vector<8x64xf32>
    %277 = arith.mulf %273, %272 : vector<8x64xf32>
    %278 = arith.addf %276, %277 : vector<8x64xf32>
    %279 = math.tanh %278 : vector<8x64xf32>
    %280 = arith.mulf %275, %279 : vector<8x64xf32>
    %281 = tpu.concatenate %280, %258 in 1 : vector<8x64xf32>, vector<8x64xf32> -> vector<8x128xf32>
    %cst_53 = arith.constant dense<0.000000e+00> : vector<8x256xf32>
    %282 = tpu.matmul %281, %8, %cst_53 {dimension_numbers = #tpu.dot_dimension_numbers<[1], [0], [0], [1], [0, 0, 1, 1], [], []>} : vector<8x128xf32>, vector<128x256xf32>, vector<8x256xf32> -> vector<8x256xf32>
    %283 = arith.addf %282, %11 : vector<8x256xf32>
    %284 = vector.extract_strided_slice %283 {offsets = [0, 0], sizes = [8, 192], strides = [1, 1]} : vector<8x256xf32> to vector<8x192xf32>
    %285 = arith.negf %284 : vector<8x192xf32>
    %286 = math.exp %285 : vector<8x192xf32>
    %cst_54 = arith.constant 1.000000e+00 : f32
    %287 = vector.broadcast %cst_54 : f32 to vector<8x192xf32>
    %288 = arith.addf %287, %286 : vector<8x192xf32>
    %289 = arith.divf %287, %288 : vector<8x192xf32>
    %290 = vector.extract_strided_slice %283 {offsets = [0, 192], sizes = [8, 64], strides = [1, 1]} : vector<8x256xf32> to vector<8x64xf32>
    %291 = math.tanh %290 : vector<8x64xf32>
    %292 = vector.extract_strided_slice %289 {offsets = [0, 0], sizes = [8, 64], strides = [1, 1]} : vector<8x192xf32> to vector<8x64xf32>
    %293 = vector.extract_strided_slice %289 {offsets = [0, 64], sizes = [8, 64], strides = [1, 1]} : vector<8x192xf32> to vector<8x64xf32>
    %294 = vector.extract_strided_slice %289 {offsets = [0, 128], sizes = [8, 64], strides = [1, 1]} : vector<8x192xf32> to vector<8x64xf32>
    %295 = arith.mulf %293, %256 : vector<8x64xf32>
    %296 = arith.mulf %292, %291 : vector<8x64xf32>
    %297 = arith.addf %295, %296 : vector<8x64xf32>
    %298 = math.tanh %297 : vector<8x64xf32>
    %299 = arith.mulf %294, %298 : vector<8x64xf32>
    %c7_i32 = arith.constant 7 : i32
    %c8_i32_55 = arith.constant 8 : i32
    %300 = arith.muli %c7_i32, %c8_i32_55 : i32
    %301 = tpu.assume_multiple %300, 8 : i32
    %302 = arith.index_cast %301 : i32 to index
    %c0_56 = arith.constant 0 : index
    %303 = vector.load %arg7[%302, %c0_56] : memref<64x256xf32, #tpu.memory_space<vmem>>, vector<8x256xf32>
    %cst_57 = arith.constant dense<0.000000e+00> : vector<8x256xf32>
    %304 = tpu.matmul %280, %7, %cst_57 {dimension_numbers = #tpu.dot_dimension_numbers<[1], [0], [0], [1], [0, 0, 1, 1], [], []>} : vector<8x64xf32>, vector<64x256xf32>, vector<8x256xf32> -> vector<8x256xf32>
    %305 = arith.addf %303, %304 : vector<8x256xf32>
    %306 = vector.extract_strided_slice %305 {offsets = [0, 0], sizes = [8, 192], strides = [1, 1]} : vector<8x256xf32> to vector<8x192xf32>
    %307 = arith.negf %306 : vector<8x192xf32>
    %308 = math.exp %307 : vector<8x192xf32>
    %cst_58 = arith.constant 1.000000e+00 : f32
    %309 = vector.broadcast %cst_58 : f32 to vector<8x192xf32>
    %310 = arith.addf %309, %308 : vector<8x192xf32>
    %311 = arith.divf %309, %310 : vector<8x192xf32>
    %312 = vector.extract_strided_slice %305 {offsets = [0, 192], sizes = [8, 64], strides = [1, 1]} : vector<8x256xf32> to vector<8x64xf32>
    %313 = math.tanh %312 : vector<8x64xf32>
    %314 = vector.extract_strided_slice %311 {offsets = [0, 0], sizes = [8, 64], strides = [1, 1]} : vector<8x192xf32> to vector<8x64xf32>
    %315 = vector.extract_strided_slice %311 {offsets = [0, 64], sizes = [8, 64], strides = [1, 1]} : vector<8x192xf32> to vector<8x64xf32>
    %316 = vector.extract_strided_slice %311 {offsets = [0, 128], sizes = [8, 64], strides = [1, 1]} : vector<8x192xf32> to vector<8x64xf32>
    %317 = arith.mulf %315, %278 : vector<8x64xf32>
    %318 = arith.mulf %314, %313 : vector<8x64xf32>
    %319 = arith.addf %317, %318 : vector<8x64xf32>
    %320 = math.tanh %319 : vector<8x64xf32>
    %321 = arith.mulf %316, %320 : vector<8x64xf32>
    %322 = tpu.concatenate %321, %299 in 1 : vector<8x64xf32>, vector<8x64xf32> -> vector<8x128xf32>
    %cst_59 = arith.constant dense<0.000000e+00> : vector<8x256xf32>
    %323 = tpu.matmul %322, %8, %cst_59 {dimension_numbers = #tpu.dot_dimension_numbers<[1], [0], [0], [1], [0, 0, 1, 1], [], []>} : vector<8x128xf32>, vector<128x256xf32>, vector<8x256xf32> -> vector<8x256xf32>
    %324 = arith.addf %323, %11 : vector<8x256xf32>
    %325 = vector.extract_strided_slice %324 {offsets = [0, 0], sizes = [8, 192], strides = [1, 1]} : vector<8x256xf32> to vector<8x192xf32>
    %326 = arith.negf %325 : vector<8x192xf32>
    %327 = math.exp %326 : vector<8x192xf32>
    %cst_60 = arith.constant 1.000000e+00 : f32
    %328 = vector.broadcast %cst_60 : f32 to vector<8x192xf32>
    %329 = arith.addf %328, %327 : vector<8x192xf32>
    %330 = arith.divf %328, %329 : vector<8x192xf32>
    %331 = vector.extract_strided_slice %324 {offsets = [0, 192], sizes = [8, 64], strides = [1, 1]} : vector<8x256xf32> to vector<8x64xf32>
    %332 = math.tanh %331 : vector<8x64xf32>
    %333 = vector.extract_strided_slice %330 {offsets = [0, 0], sizes = [8, 64], strides = [1, 1]} : vector<8x192xf32> to vector<8x64xf32>
    %334 = vector.extract_strided_slice %330 {offsets = [0, 64], sizes = [8, 64], strides = [1, 1]} : vector<8x192xf32> to vector<8x64xf32>
    %335 = vector.extract_strided_slice %330 {offsets = [0, 128], sizes = [8, 64], strides = [1, 1]} : vector<8x192xf32> to vector<8x64xf32>
    %336 = arith.mulf %334, %297 : vector<8x64xf32>
    %337 = arith.mulf %333, %332 : vector<8x64xf32>
    %338 = arith.addf %336, %337 : vector<8x64xf32>
    %339 = math.tanh %338 : vector<8x64xf32>
    %340 = arith.mulf %335, %339 : vector<8x64xf32>
    %c8_i32_61 = arith.constant 8 : i32
    %c0_62 = arith.constant 0 : index
    %c0_63 = arith.constant 0 : index
    %341 = vector.load %arg6[%c0_62, %c0_63] : memref<8x64xf32, #tpu.memory_space<vmem>>, vector<8x64xf32>
    tpu.vector_store %arg6[%c0_62, %c0_63], %340 {strides = array<i32>} : memref<8x64xf32, #tpu.memory_space<vmem>>, vector<8x64xf32>,
    return
  }
}

</mosaic_0001>

<llo_original>
// kernel: tpu_custom_call.1
$region0: #{tpu_custom_call.1}
  #allocation0 [shape = 'u32[]', space=smem, size = 0x4, offset = 0x4, fixed_abs, tag = 'smem constant byte address 0x4 - core index']
  #allocation1 [shape = 'u32[144,128]{1,0:T(1,128)}', space=vmem, size = 0x12000, scoped, tag = 'internal scratch']
  #allocation2 [shape = 'f32[64,256]{1,0:T(8,128)}', space=vmem, size = 0x10000, scoped, tag = 'scratch operand']
  %s0 = inlined_call_operand.vmem [shape: f32[64,12], index: 0, kind: input, shape index: {}]
  %s1 = inlined_call_operand.vmem [shape: f32[12,256], index: 1, kind: input, shape index: {}]
  %s2 = inlined_call_operand.vmem [shape: f32[1,256], index: 2, kind: input, shape index: {}]
  %s3 = inlined_call_operand.hbm [shape: f32[64,256], index: 3, kind: input, shape index: {}]
  %s4 = inlined_call_operand.hbm [shape: f32[128,256], index: 4, kind: input, shape index: {}]
  %s5 = inlined_call_operand.vmem [shape: f32[1,256], index: 5, kind: input, shape index: {}]
  %s6 = inlined_call_operand.hbm [shape: f32[8,64], index: 6, kind: output, shape index: {}]
  %s7 = sld [smem:[#allocation0]]
  $region42: #{tpu_custom_call.1} parent=0
    _
  %s9 = ssub.s32 1, %s7
  %s10 = scalar_select 0, %s9, %s7
  $region1: #{tpu_custom_call.1} parent=0
    #allocation3 [shape = 'u8[65536]{0}', space=vmem, size = 0x10000, scoped, tag = 'input window, operand 3, single buffered']
    #allocation4 [shape = 's32[1]{0}', space=sflag, size = 0x4, scoped, tag = 'scoped memory for tpu_custom_call.1']
    #allocation5 [shape = 's32[1]{0}', space=sflag, size = 0x4, scoped, tag = 'scoped memory for tpu_custom_call.1']
    #allocation6 [shape = 'u8[131072]{0}', space=vmem, size = 0x20000, scoped, tag = 'input window, operand 4, single buffered']
    #allocation7 [shape = 's32[1]{0}', space=sflag, size = 0x4, scoped, tag = 'scoped memory for tpu_custom_call.1']
    #allocation8 [shape = 'u8[4096]{0}', space=vmem, size = 0x1000, scoped, tag = 'output window, operand 0, single buffered']
    %11 = vsyncpa [#allocation4], 0
    %12 = vsyncpa [#allocation7], 0
    %13 = vsyncpa [#allocation5], 0
    // Predicated region
    $region2: #{tpu_custom_call.1} parent=1 // pred_check
      _
    $region3: #{tpu_custom_call.1} parent=1 // pred_check_branch
      %15 = sbr.rel (0) target = $region5
    $region4: #{tpu_custom_call.1} parent=1 // pred_region
      _
    $region5: #{tpu_custom_call.1} parent=1 // pred_fallthru
      _
    // Predicated region
    $region6: #{tpu_custom_call.1} parent=1 // pred_check
      _
    $region7: #{tpu_custom_call.1} parent=1 // pred_check_branch
      %17 = sbr.rel (0) target = $region9
    $region8: #{tpu_custom_call.1} parent=1 // pred_region
      _
    $region9: #{tpu_custom_call.1} parent=1 // pred_fallthru
      _
    // Predicated region
    $region10: #{tpu_custom_call.1} parent=1 // pred_check
      _
    $region11: #{tpu_custom_call.1} parent=1 // pred_check_branch
      %19 = sbr.rel (0) target = $region13
    $region12: #{tpu_custom_call.1} parent=1 // pred_region
      _
    $region13: #{tpu_custom_call.1} parent=1 // pred_fallthru
      _
    // Predicated region
    $region14: #{tpu_custom_call.1} parent=1 // pred_check
      _
    $region15: #{tpu_custom_call.1} parent=1 // pred_check_branch
      %21 = sbr.rel (0) target = $region17
    $region16: #{tpu_custom_call.1} parent=1 // pred_region
      %s23 = ssub.s32 2048, 2048
      %24 = vsyncadd [#allocation4], %s23
      %s25 = sshll.u32 [#allocation3], 4
      %s26 = int_to_ptr.vmem [resolvable:$true] %s25
      %31 = dma.hbm_to_vmem [thread:$0]  %s3, 2048, %s26, [#allocation4], 256, 256, 16
    $region17: #{tpu_custom_call.1} parent=1 // pred_fallthru
      _
    // Predicated region
    $region18: #{tpu_custom_call.1} parent=1 // pred_check
      _
    $region19: #{tpu_custom_call.1} parent=1 // pred_check_branch
      %33 = sbr.rel (0) target = $region21
    $region20: #{tpu_custom_call.1} parent=1 // pred_region
      %s35 = ssub.s32 4096, 4096
      %36 = vsyncadd [#allocation7], %s35
      %s37 = sshll.u32 [#allocation6], 4
      %s38 = int_to_ptr.vmem [resolvable:$true] %s37
      %43 = dma.hbm_to_vmem [thread:$0]  %s4, 4096, %s38, [#allocation7], 256, 256, 16
    $region21: #{tpu_custom_call.1} parent=1 // pred_fallthru
      _
    // Predicated region
    $region22: #{tpu_custom_call.1} parent=1 // pred_check
      _
    $region23: #{tpu_custom_call.1} parent=1 // pred_check_branch
      %45 = sbr.rel (0) target = $region25
    $region24: #{tpu_custom_call.1} parent=1 // pred_region
      _
    $region25: #{tpu_custom_call.1} parent=1 // pred_fallthru
      _
    // Predicated region
    $region26: #{tpu_custom_call.1} parent=1 // pred_check
      _
    $region27: #{tpu_custom_call.1} parent=1 // pred_check_branch
      %47 = sbr.rel (0) target = $region29
    $region28: #{tpu_custom_call.1} parent=1 // pred_region
      %48 = dma.done [#allocation4], 2048
    $region29: #{tpu_custom_call.1} parent=1 // pred_fallthru
      _
    // Predicated region
    $region30: #{tpu_custom_call.1} parent=1 // pred_check
      _
    $region31: #{tpu_custom_call.1} parent=1 // pred_check_branch
      %50 = sbr.rel (0) target = $region33
    $region32: #{tpu_custom_call.1} parent=1 // pred_region
      %51 = dma.done [#allocation7], 4096
    $region33: #{tpu_custom_call.1} parent=1 // pred_fallthru
      _
    %v52 = vld [vmem:[%s0] sm:$0xff]
    %v53 = vld [vmem:[%s0 + $0x8] sm:$0xff]
    %v54 = vld [vmem:[%s0 + $0x10] sm:$0xff]
    %v55 = vld [vmem:[%s0 + $0x18] sm:$0xff]
    %v56 = vld [vmem:[%s0 + $0x20] sm:$0xff]
    %v57 = vld [vmem:[%s0 + $0x28] sm:$0xff]
    %v58 = vld [vmem:[%s0 + $0x30] sm:$0xff]
    %v59 = vld [vmem:[%s0 + $0x38] sm:$0xff]
    %v60 = vld [vmem:[%s1] sm:$0xff]
    %v61 = vld [vmem:[%s1 + $0x8] sm:$0xff]
    %v62 = vld [vmem:[%s1 + $0x10] sm:$0xf]
    %v63 = vld [vmem:[%s1 + $0x18] sm:$0xf]
    %v64 = vld [vmem:[%s2] sm:$0x3]
    %v66 = vlaneseq
    %v67 = vshrl.u32 %v66, 7
    %v68 = vsub.s32 0, %v67
    %v69 = vrot.slane %v64, %v68
    %v70 = vlaneseq
    %v71 = vshrl.u32 %v70, 7
    %v72 = vsub.s32 1, %v71
    %v73 = vrot.slane %v64, %v72
    %vm76 = vcmask 97280
    %v78 = vsel %vm76, %v52, 0
    %v81 = vsel %vm76, %v53, 0
    %v84 = vsel %vm76, %v54, 0
    %v87 = vsel %vm76, %v55, 0
    %v90 = vsel %vm76, %v56, 0
    %v93 = vsel %vm76, %v57, 0
    %v96 = vsel %vm76, %v58, 0
    %v99 = vsel %vm76, %v59, 0
    %vm101 = vcmask 1043456
    %v103 = vsel %vm101, %v62, 0
    %v106 = vsel %vm101, %v63, 0
    %108 = vmatprep.subr.mxu0 %v61
    %109 = vmatpush1.msra.mxu0 %v60
    %110 = vmatprep.subr.mxu0 %v106
    %111 = vmatpush1.msra.mxu0 %v103
    %112 = vmatprep.subr.mxu0 0.0
    %113 = vmatpush1.msra.mxu0 0.0
    %114 = vmatprep.subr.mxu0 0.0
    %115 = vmatpush1.msra.mxu0 0.0
    %116 = vmatprep.subr.mxu0 0.0
    %117 = vmatpush1.msra.mxu0 0.0
    %118 = vmatprep.subr.mxu0 0.0
    %119 = vmatpush1.msra.mxu0 0.0
    %120 = vmatprep.subr.mxu0 0.0
    %121 = vmatpush1.msra.mxu0 0.0
    %122 = vmatprep.subr.mxu0 0.0
    %123 = vmatpush1.msra.mxu0 0.0
    %124 = vmatprep.subr.mxu0 0.0
    %125 = vmatpush1.msra.mxu0 0.0
    %126 = vmatprep.subr.mxu0 0.0
    %127 = vmatpush1.msra.mxu0 0.0
    %128 = vmatprep.subr.mxu0 0.0
    %129 = vmatpush1.msra.mxu0 0.0
    %130 = vmatprep.subr.mxu0 0.0
    %131 = vmatpush1.msra.mxu0 0.0
    %132 = vmatprep.subr.mxu0 0.0
    %133 = vmatpush1.msra.mxu0 0.0
    %134 = vmatprep.subr.mxu0 0.0
    %135 = vmatpush1.msra.mxu0 0.0
    %136 = vmatprep.subr.mxu0 0.0
    %137 = vmatpush1.msra.mxu0 0.0
    %138 = vmatprep.subr.mxu0 0.0
    %139 = vmatpush1.msra.mxu0 0.0
    %140 = vmatprep.subr.mxu0 0.0
    %141 = vmatpush1.msra.mxu0 0.0
    %142 = vmatprep.subr.mxu0 0.0
    %143 = vmatpush1.msra.mxu0 0.0
    %144 = vmatprep.subr.mxu0 0.0
    %145 = vmatpush1.msra.mxu0 0.0
    %146 = vmatprep.subr.mxu0 0.0
    %147 = vmatpush1.msra.mxu0 0.0
    %148 = vmatprep.subr.mxu0 0.0
    %149 = vmatpush1.msra.mxu0 0.0
    %150 = vmatprep.subr.mxu0 0.0
    %151 = vmatpush1.msra.mxu0 0.0
    %152 = vmatprep.subr.mxu0 0.0
    %153 = vmatpush1.msra.mxu0 0.0
    %154 = vmatprep.subr.mxu0 0.0
    %155 = vmatpush1.msra.mxu0 0.0
    %156 = vmatprep.subr.mxu0 0.0
    %157 = vmatpush1.msra.mxu0 0.0
    %158 = vmatprep.subr.mxu0 0.0
    %159 = vmatpush1.msra.mxu0 0.0
    %160 = vmatprep.subr.mxu0 0.0
    %161 = vmatpush1.msra.mxu0 0.0
    %162 = vmatprep.subr.mxu0 0.0
    %163 = vmatpush1.msra.mxu0 0.0
    %164 = vmatprep.subr.mxu0 0.0
    %165 = vmatpush1.msra.mxu0 0.0
    %166 = vmatprep.subr.mxu0 0.0
    %167 = vmatpush1.msra.mxu0 0.0
    %168 = vmatprep.subr.mxu0 0.0
    %169 = vmatpush1.msra.mxu0 0.0
    %170 = vmatprep.subr.mxu0 0.0
    %171 = vmatpush1.msra.mxu0 0.0
    %172 = vmatprep.mubr.f32.mxu0 0.0
    %173 = vmatmul.mubr.f32.gmra.mrb[0].mxu0 %v78
    %v174 = vpop.f32.mrb[0].mxu0
    %v175 = vadd.f32 %v69, %v174
    %v176 = vpop.f32.mrb[0].mxu0
    %v177 = vadd.f32 %v73, %v176
    %178 = vmatprep.mubr.f32.mxu0 0.0
    %179 = vmatmul.mubr.f32.gmra.mrb[0].mxu0 %v81
    %v180 = vpop.f32.mrb[0].mxu0
    %v181 = vadd.f32 %v69, %v180
    %v182 = vpop.f32.mrb[0].mxu0
    %v183 = vadd.f32 %v73, %v182
    %184 = vmatprep.mubr.f32.mxu0 0.0
    %185 = vmatmul.mubr.f32.gmra.mrb[0].mxu0 %v84
    %v186 = vpop.f32.mrb[0].mxu0
    %v187 = vadd.f32 %v69, %v186
    %v188 = vpop.f32.mrb[0].mxu0
    %v189 = vadd.f32 %v73, %v188
    %190 = vmatprep.mubr.f32.mxu0 0.0
    %191 = vmatmul.mubr.f32.gmra.mrb[0].mxu0 %v87
    %v192 = vpop.f32.mrb[0].mxu0
    %v193 = vadd.f32 %v69, %v192
    %v194 = vpop.f32.mrb[0].mxu0
    %v195 = vadd.f32 %v73, %v194
    %196 = vmatprep.mubr.f32.mxu0 0.0
    %197 = vmatmul.mubr.f32.gmra.mrb[0].mxu0 %v90
    %v198 = vpop.f32.mrb[0].mxu0
    %v199 = vadd.f32 %v69, %v198
    %v200 = vpop.f32.mrb[0].mxu0
    %v201 = vadd.f32 %v73, %v200
    %202 = vmatprep.mubr.f32.mxu0 0.0
    %203 = vmatmul.mubr.f32.gmra.mrb[0].mxu0 %v93
    %v204 = vpop.f32.mrb[0].mxu0
    %v205 = vadd.f32 %v69, %v204
    %v206 = vpop.f32.mrb[0].mxu0
    %v207 = vadd.f32 %v73, %v206
    %208 = vmatprep.mubr.f32.mxu0 0.0
    %209 = vmatmul.mubr.f32.gmra.mrb[0].mxu0 %v96
    %v210 = vpop.f32.mrb[0].mxu0
    %v211 = vadd.f32 %v69, %v210
    %v212 = vpop.f32.mrb[0].mxu0
    %v213 = vadd.f32 %v73, %v212
    %214 = vmatprep.mubr.f32.mxu0 0.0
    %215 = vmatmul.mubr.f32.gmra.mrb[0].mxu0 %v99
    %v216 = vpop.f32.mrb[0].mxu0
    %v217 = vadd.f32 %v69, %v216
    %v218 = vpop.f32.mrb[0].mxu0
    %v219 = vadd.f32 %v73, %v218
    %220 = vdwg.mxu0
    %221 = vst [vmem:[#allocation2] sm:$0xff] %v175
    %222 = vst [vmem:[#allocation2 + $0x8] sm:$0xff] %v177
    %223 = vst [vmem:[#allocation2 + $0x10] sm:$0xff] %v181
    %224 = vst [vmem:[#allocation2 + $0x18] sm:$0xff] %v183
    %225 = vst [vmem:[#allocation2 + $0x20] sm:$0xff] %v187
    %226 = vst [vmem:[#allocation2 + $0x28] sm:$0xff] %v189
    %227 = vst [vmem:[#allocation2 + $0x30] sm:$0xff] %v193
    %228 = vst [vmem:[#allocation2 + $0x38] sm:$0xff] %v195
    %229 = vst [vmem:[#allocation2 + $0x40] sm:$0xff] %v199
    %230 = vst [vmem:[#allocation2 + $0x48] sm:$0xff] %v201
    %231 = vst [vmem:[#allocation2 + $0x50] sm:$0xff] %v205
    %232 = vst [vmem:[#allocation2 + $0x58] sm:$0xff] %v207
    %233 = vst [vmem:[#allocation2 + $0x60] sm:$0xff] %v211
    %234 = vst [vmem:[#allocation2 + $0x68] sm:$0xff] %v213
    %235 = vst [vmem:[#allocation2 + $0x70] sm:$0xff] %v217
    %236 = vst [vmem:[#allocation2 + $0x78] sm:$0xff] %v219
    %v237 = vld [vmem:[#allocation3] sm:$0xff]
    %v238 = vld [vmem:[#allocation3 + $0x8] sm:$0xff]
    %v239 = vld [vmem:[#allocation3 + $0x10] sm:$0xff]
    %v240 = vld [vmem:[#allocation3 + $0x18] sm:$0xff]
    %v241 = vld [vmem:[#allocation3 + $0x20] sm:$0xff]
    %v242 = vld [vmem:[#allocation3 + $0x28] sm:$0xff]
    %v243 = vld [vmem:[#allocation3 + $0x30] sm:$0xff]
    %v244 = vld [vmem:[#allocation3 + $0x38] sm:$0xff]
    %v245 = vld [vmem:[#allocation3 + $0x40] sm:$0xff]
    %v246 = vld [vmem:[#allocation3 + $0x48] sm:$0xff]
    %v247 = vld [vmem:[#allocation3 + $0x50] sm:$0xff]
    %v248 = vld [vmem:[#allocation3 + $0x58] sm:$0xff]
    %v249 = vld [vmem:[#allocation3 + $0x60] sm:$0xff]
    %v250 = vld [vmem:[#allocation3 + $0x68] sm:$0xff]
    %v251 = vld [vmem:[#allocation3 + $0x70] sm:$0xff]
    %v252 = vld [vmem:[#allocation3 + $0x78] sm:$0xff]
    %v253 = vld [vmem:[#allocation6] sm:$0xff]
    %v254 = vld [vmem:[#allocation6 + $0x8] sm:$0xff]
    %v255 = vld [vmem:[#allocation6 + $0x10] sm:$0xff]
    %v256 = vld [vmem:[#allocation6 + $0x18] sm:$0xff]
    %v257 = vld [vmem:[#allocation6 + $0x20] sm:$0xff]
    %v258 = vld [vmem:[#allocation6 + $0x28] sm:$0xff]
    %v259 = vld [vmem:[#allocation6 + $0x30] sm:$0xff]
    %v260 = vld [vmem:[#allocation6 + $0x38] sm:$0xff]
    %v261 = vld [vmem:[#allocation6 + $0x40] sm:$0xff]
    %v262 = vld [vmem:[#allocation6 + $0x48] sm:$0xff]
    %v263 = vld [vmem:[#allocation6 + $0x50] sm:$0xff]
    %v264 = vld [vmem:[#allocation6 + $0x58] sm:$0xff]
    %v265 = vld [vmem:[#allocation6 + $0x60] sm:$0xff]
    %v266 = vld [vmem:[#allocation6 + $0x68] sm:$0xff]
    %v267 = vld [vmem:[#allocation6 + $0x70] sm:$0xff]
    %v268 = vld [vmem:[#allocation6 + $0x78] sm:$0xff]
    %v269 = vld [vmem:[#allocation6 + $0x80] sm:$0xff]
    %v270 = vld [vmem:[#allocation6 + $0x88] sm:$0xff]
    %v271 = vld [vmem:[#allocation6 + $0x90] sm:$0xff]
    %v272 = vld [vmem:[#allocation6 + $0x98] sm:$0xff]
    %v273 = vld [vmem:[#allocation6 + $0xa0] sm:$0xff]
    %v274 = vld [vmem:[#allocation6 + $0xa8] sm:$0xff]
    %v275 = vld [vmem:[#allocation6 + $0xb0] sm:$0xff]
    %v276 = vld [vmem:[#allocation6 + $0xb8] sm:$0xff]
    %v277 = vld [vmem:[#allocation6 + $0xc0] sm:$0xff]
    %v278 = vld [vmem:[#allocation6 + $0xc8] sm:$0xff]
    %v279 = vld [vmem:[#allocation6 + $0xd0] sm:$0xff]
    %v280 = vld [vmem:[#allocation6 + $0xd8] sm:$0xff]
    %v281 = vld [vmem:[#allocation6 + $0xe0] sm:$0xff]
    %v282 = vld [vmem:[#allocation6 + $0xe8] sm:$0xff]
    %v283 = vld [vmem:[#allocation6 + $0xf0] sm:$0xff]
    %v284 = vld [vmem:[#allocation6 + $0xf8] sm:$0xff]
    %v285 = vld [vmem:[%s5] sm:$0x3]
    %v287 = vlaneseq
    %v288 = vshrl.u32 %v287, 7
    %v289 = vsub.s32 0, %v288
    %v290 = vrot.slane %v285, %v289
    %v291 = vlaneseq
    %v292 = vshrl.u32 %v291, 7
    %v293 = vsub.s32 1, %v292
    %v294 = vrot.slane %v285, %v293
    %s297 = smul.u32 0, 2
    %s298 = smul.addr %s297, 8
    %s299 = scalar_lea.vmem [#allocation2], %s298
    %v300 = vld [vmem:[%s299] sm:$0xff]
    %v301 = vld [vmem:[%s299 + $0x8] sm:$0xff]
    %vm302 = vcmask 523264
    %v304 = vsel %vm302, 0.0, 0
    %306 = vmatprep.subr.mxu0 %v238
    %307 = vmatpush1.msra.mxu0 %v237
    %308 = vmatprep.subr.mxu0 %v240
    %309 = vmatpush1.msra.mxu0 %v239
    %310 = vmatprep.subr.mxu0 %v242
    %311 = vmatpush1.msra.mxu0 %v241
    %312 = vmatprep.subr.mxu0 %v244
    %313 = vmatpush1.msra.mxu0 %v243
    %314 = vmatprep.subr.mxu0 %v246
    %315 = vmatpush1.msra.mxu0 %v245
    %316 = vmatprep.subr.mxu0 %v248
    %317 = vmatpush1.msra.mxu0 %v247
    %318 = vmatprep.subr.mxu0 %v250
    %319 = vmatpush1.msra.mxu0 %v249
    %320 = vmatprep.subr.mxu0 %v252
    %321 = vmatpush1.msra.mxu0 %v251
    %322 = vmatprep.subr.mxu0 0.0
    %323 = vmatpush1.msra.mxu0 0.0
    %324 = vmatprep.subr.mxu0 0.0
    %325 = vmatpush1.msra.mxu0 0.0
    %326 = vmatprep.subr.mxu0 0.0
    %327 = vmatpush1.msra.mxu0 0.0
    %328 = vmatprep.subr.mxu0 0.0
    %329 = vmatpush1.msra.mxu0 0.0
    %330 = vmatprep.subr.mxu0 0.0
    %331 = vmatpush1.msra.mxu0 0.0
    %332 = vmatprep.subr.mxu0 0.0
    %333 = vmatpush1.msra.mxu0 0.0
    %334 = vmatprep.subr.mxu0 0.0
    %335 = vmatpush1.msra.mxu0 0.0
    %336 = vmatprep.subr.mxu0 0.0
    %337 = vmatpush1.msra.mxu0 0.0
    %338 = vmatprep.subr.mxu0 0.0
    %339 = vmatpush1.msra.mxu0 0.0
    %340 = vmatprep.subr.mxu0 0.0
    %341 = vmatpush1.msra.mxu0 0.0
    %342 = vmatprep.subr.mxu0 0.0
    %343 = vmatpush1.msra.mxu0 0.0
    %344 = vmatprep.subr.mxu0 0.0
    %345 = vmatpush1.msra.mxu0 0.0
    %346 = vmatprep.subr.mxu0 0.0
    %347 = vmatpush1.msra.mxu0 0.0
    %348 = vmatprep.subr.mxu0 0.0
    %349 = vmatpush1.msra.mxu0 0.0
    %350 = vmatprep.subr.mxu0 0.0
    %351 = vmatpush1.msra.mxu0 0.0
    %352 = vmatprep.subr.mxu0 0.0
    %353 = vmatpush1.msra.mxu0 0.0
    %354 = vmatprep.subr.mxu0 0.0
    %355 = vmatpush1.msra.mxu0 0.0
    %356 = vmatprep.subr.mxu0 0.0
    %357 = vmatpush1.msra.mxu0 0.0
    %358 = vmatprep.subr.mxu0 0.0
    %359 = vmatpush1.msra.mxu0 0.0
    %360 = vmatprep.subr.mxu0 0.0
    %361 = vmatpush1.msra.mxu0 0.0
    %362 = vmatprep.subr.mxu0 0.0
    %363 = vmatpush1.msra.mxu0 0.0
    %364 = vmatprep.subr.mxu0 0.0
    %365 = vmatpush1.msra.mxu0 0.0
    %366 = vmatprep.subr.mxu0 0.0
    %367 = vmatpush1.msra.mxu0 0.0
    %368 = vmatprep.subr.mxu0 0.0
    %369 = vmatpush1.msra.mxu0 0.0
    %370 = vmatprep.mubr.f32.mxu0 0.0
    %371 = vmatmul.mubr.f32.gmra.mrb[0].mxu0 %v304
    %v372 = vpop.f32.mrb[0].mxu0
    %v373 = vadd.f32 0.0, %v372
    %v374 = vpop.f32.mrb[0].mxu0
    %v375 = vadd.f32 0.0, %v374
    %376 = vdwg.mxu0
    %v377 = vadd.f32 %v300, %v373
    %v378 = vadd.f32 %v301, %v375
    %v379 = vxor.u32 %v377, 2147483648
    %v380 = vxor.u32 %v378, 2147483648
    %v381 = vmul.f32 %v379, 1.442695
    %v382 = vpow.pop %v381
    %v383 = vmul.f32 %v380, 1.442695
    %v384 = vpow.pop %v383
    %v385 = vadd.f32 %v382, 1.0
    %v386 = vadd.f32 %v384, 1.0
    %v387 = vrcp.pop %v385
    %v388 = vmul.f32 1.0, %v387
    %v389 = vrcp.pop %v386
    %v390 = vmul.f32 1.0, %v389
    %v391 = vtanh.pop %v378
    %v392 = vmul.f32 %v388, 0.0
    %394 = vrot.lane.b32.xlu0 %v391, 64
    %v395 = vpop.permute.xlu0 %394
    %v397 = vmul.f32 %v388, %v395
    %399 = vrot.lane.b32.xlu0 %v397, 64
    %v400 = vpop.permute.xlu0 %399
    %v402 = vadd.f32 %v392, %v400
    %v403 = vtanh.pop %v402
    %405 = vrot.lane.b32.xlu0 %v403, 64
    %v406 = vpop.permute.xlu0 %405
    %v408 = vmul.f32 %v390, %v406
    %v409 = vsel %vm302, %v408, 0.0
    %410 = vmatprep.subr.mxu0 %v254
    %411 = vmatpush1.msra.mxu0 %v253
    %412 = vmatprep.subr.mxu0 %v256
    %413 = vmatpush1.msra.mxu0 %v255
    %414 = vmatprep.subr.mxu0 %v258
    %415 = vmatpush1.msra.mxu0 %v257
    %416 = vmatprep.subr.mxu0 %v260
    %417 = vmatpush1.msra.mxu0 %v259
    %418 = vmatprep.subr.mxu0 %v262
    %419 = vmatpush1.msra.mxu0 %v261
    %420 = vmatprep.subr.mxu0 %v264
    %421 = vmatpush1.msra.mxu0 %v263
    %422 = vmatprep.subr.mxu0 %v266
    %423 = vmatpush1.msra.mxu0 %v265
    %424 = vmatprep.subr.mxu0 %v268
    %425 = vmatpush1.msra.mxu0 %v267
    %426 = vmatprep.subr.mxu0 %v270
    %427 = vmatpush1.msra.mxu0 %v269
    %428 = vmatprep.subr.mxu0 %v272
    %429 = vmatpush1.msra.mxu0 %v271
    %430 = vmatprep.subr.mxu0 %v274
    %431 = vmatpush1.msra.mxu0 %v273
    %432 = vmatprep.subr.mxu0 %v276
    %433 = vmatpush1.msra.mxu0 %v275
    %434 = vmatprep.subr.mxu0 %v278
    %435 = vmatpush1.msra.mxu0 %v277
    %436 = vmatprep.subr.mxu0 %v280
    %437 = vmatpush1.msra.mxu0 %v279
    %438 = vmatprep.subr.mxu0 %v282
    %439 = vmatpush1.msra.mxu0 %v281
    %440 = vmatprep.subr.mxu0 %v284
    %441 = vmatpush1.msra.mxu0 %v283
    %442 = vmatprep.subr.mxu0 0.0
    %443 = vmatpush1.msra.mxu0 0.0
    %444 = vmatprep.subr.mxu0 0.0
    %445 = vmatpush1.msra.mxu0 0.0
    %446 = vmatprep.subr.mxu0 0.0
    %447 = vmatpush1.msra.mxu0 0.0
    %448 = vmatprep.subr.mxu0 0.0
    %449 = vmatpush1.msra.mxu0 0.0
    %450 = vmatprep.subr.mxu0 0.0
    %451 = vmatpush1.msra.mxu0 0.0
    %452 = vmatprep.subr.mxu0 0.0
    %453 = vmatpush1.msra.mxu0 0.0
    %454 = vmatprep.subr.mxu0 0.0
    %455 = vmatpush1.msra.mxu0 0.0
    %456 = vmatprep.subr.mxu0 0.0
    %457 = vmatpush1.msra.mxu0 0.0
    %458 = vmatprep.subr.mxu0 0.0
    %459 = vmatpush1.msra.mxu0 0.0
    %460 = vmatprep.subr.mxu0 0.0
    %461 = vmatpush1.msra.mxu0 0.0
    %462 = vmatprep.subr.mxu0 0.0
    %463 = vmatpush1.msra.mxu0 0.0
    %464 = vmatprep.subr.mxu0 0.0
    %465 = vmatpush1.msra.mxu0 0.0
    %466 = vmatprep.subr.mxu0 0.0
    %467 = vmatpush1.msra.mxu0 0.0
    %468 = vmatprep.subr.mxu0 0.0
    %469 = vmatpush1.msra.mxu0 0.0
    %470 = vmatprep.subr.mxu0 0.0
    %471 = vmatpush1.msra.mxu0 0.0
    %472 = vmatprep.subr.mxu0 0.0
    %473 = vmatpush1.msra.mxu0 0.0
    %474 = vmatprep.mubr.f32.mxu0 0.0
    %475 = vmatmul.mubr.f32.gmra.mrb[0].mxu0 %v409
    %v476 = vpop.f32.mrb[0].mxu0
    %v477 = vadd.f32 %v290, %v476
    %v478 = vpop.f32.mrb[0].mxu0
    %v479 = vadd.f32 %v294, %v478
    %480 = vdwg.mxu0
    %v481 = vxor.u32 %v477, 2147483648
    %v482 = vxor.u32 %v479, 2147483648
    %v483 = vmul.f32 %v481, 1.442695
    %v484 = vpow.pop %v483
    %v485 = vmul.f32 %v482, 1.442695
    %v486 = vpow.pop %v485
    %v487 = vadd.f32 %v484, 1.0
    %v488 = vadd.f32 %v486, 1.0
    %v489 = vrcp.pop %v487
    %v490 = vmul.f32 1.0, %v489
    %v491 = vrcp.pop %v488
    %v492 = vmul.f32 1.0, %v491
    %v493 = vtanh.pop %v479
    %v494 = vmul.f32 %v490, 0.0
    %496 = vrot.lane.b32.xlu0 %v493, 64
    %v497 = vpop.permute.xlu0 %496
    %v499 = vmul.f32 %v490, %v497
    %501 = vrot.lane.b32.xlu0 %v499, 64
    %v502 = vpop.permute.xlu0 %501
    %v504 = vadd.f32 %v494, %v502
    %v505 = vtanh.pop %v504
    %507 = vrot.lane.b32.xlu0 %v505, 64
    %v508 = vpop.permute.xlu0 %507
    %v510 = vmul.f32 %v492, %v508
    %s511 = smul.u32 1, 2
    %s512 = smul.addr %s511, 8
    %s513 = scalar_lea.vmem [#allocation2], %s512
    %v514 = vld [vmem:[%s513] sm:$0xff]
    %v515 = vld [vmem:[%s513 + $0x8] sm:$0xff]
    %v517 = vsel %vm302, %v408, 0
    %519 = vmatprep.subr.mxu0 %v238
    %520 = vmatpush1.msra.mxu0 %v237
    %521 = vmatprep.subr.mxu0 %v240
    %522 = vmatpush1.msra.mxu0 %v239
    %523 = vmatprep.subr.mxu0 %v242
    %524 = vmatpush1.msra.mxu0 %v241
    %525 = vmatprep.subr.mxu0 %v244
    %526 = vmatpush1.msra.mxu0 %v243
    %527 = vmatprep.subr.mxu0 %v246
    %528 = vmatpush1.msra.mxu0 %v245
    %529 = vmatprep.subr.mxu0 %v248
    %530 = vmatpush1.msra.mxu0 %v247
    %531 = vmatprep.subr.mxu0 %v250
    %532 = vmatpush1.msra.mxu0 %v249
    %533 = vmatprep.subr.mxu0 %v252
    %534 = vmatpush1.msra.mxu0 %v251
    %535 = vmatprep.subr.mxu0 0.0
    %536 = vmatpush1.msra.mxu0 0.0
    %537 = vmatprep.subr.mxu0 0.0
    %538 = vmatpush1.msra.mxu0 0.0
    %539 = vmatprep.subr.mxu0 0.0
    %540 = vmatpush1.msra.mxu0 0.0
    %541 = vmatprep.subr.mxu0 0.0
    %542 = vmatpush1.msra.mxu0 0.0
    %543 = vmatprep.subr.mxu0 0.0
    %544 = vmatpush1.msra.mxu0 0.0
    %545 = vmatprep.subr.mxu0 0.0
    %546 = vmatpush1.msra.mxu0 0.0
    %547 = vmatprep.subr.mxu0 0.0
    %548 = vmatpush1.msra.mxu0 0.0
    %549 = vmatprep.subr.mxu0 0.0
    %550 = vmatpush1.msra.mxu0 0.0
    %551 = vmatprep.subr.mxu0 0.0
    %552 = vmatpush1.msra.mxu0 0.0
    %553 = vmatprep.subr.mxu0 0.0
    %554 = vmatpush1.msra.mxu0 0.0
    %555 = vmatprep.subr.mxu0 0.0
    %556 = vmatpush1.msra.mxu0 0.0
    %557 = vmatprep.subr.mxu0 0.0
    %558 = vmatpush1.msra.mxu0 0.0
    %559 = vmatprep.subr.mxu0 0.0
    %560 = vmatpush1.msra.mxu0 0.0
    %561 = vmatprep.subr.mxu0 0.0
    %562 = vmatpush1.msra.mxu0 0.0
    %563 = vmatprep.subr.mxu0 0.0
    %564 = vmatpush1.msra.mxu0 0.0
    %565 = vmatprep.subr.mxu0 0.0
    %566 = vmatpush1.msra.mxu0 0.0
    %567 = vmatprep.subr.mxu0 0.0
    %568 = vmatpush1.msra.mxu0 0.0
    %569 = vmatprep.subr.mxu0 0.0
    %570 = vmatpush1.msra.mxu0 0.0
    %571 = vmatprep.subr.mxu0 0.0
    %572 = vmatpush1.msra.mxu0 0.0
    %573 = vmatprep.subr.mxu0 0.0
    %574 = vmatpush1.msra.mxu0 0.0
    %575 = vmatprep.subr.mxu0 0.0
    %576 = vmatpush1.msra.mxu0 0.0
    %577 = vmatprep.subr.mxu0 0.0
    %578 = vmatpush1.msra.mxu0 0.0
    %579 = vmatprep.subr.mxu0 0.0
    %580 = vmatpush1.msra.mxu0 0.0
    %581 = vmatprep.subr.mxu0 0.0
    %582 = vmatpush1.msra.mxu0 0.0
    %583 = vmatprep.mubr.f32.mxu0 0.0
    %584 = vmatmul.mubr.f32.gmra.mrb[0].mxu0 %v517
    %v585 = vpop.f32.mrb[0].mxu0
    %v586 = vadd.f32 0.0, %v585
    %v587 = vpop.f32.mrb[0].mxu0
    %v588 = vadd.f32 0.0, %v587
    %589 = vdwg.mxu0
    %v590 = vadd.f32 %v514, %v586
    %v591 = vadd.f32 %v515, %v588
    %v592 = vxor.u32 %v590, 2147483648
    %v593 = vxor.u32 %v591, 2147483648
    %v594 = vmul.f32 %v592, 1.442695
    %v595 = vpow.pop %v594
    %v596 = vmul.f32 %v593, 1.442695
    %v597 = vpow.pop %v596
    %v598 = vadd.f32 %v595, 1.0
    %v599 = vadd.f32 %v597, 1.0
    %v600 = vrcp.pop %v598
    %v601 = vmul.f32 1.0, %v600
    %v602 = vrcp.pop %v599
    %v603 = vmul.f32 1.0, %v602
    %v604 = vtanh.pop %v591
    %v605 = vmul.f32 %v601, %v402
    %607 = vrot.lane.b32.xlu0 %v604, 64
    %v608 = vpop.permute.xlu0 %607
    %v610 = vmul.f32 %v601, %v608
    %612 = vrot.lane.b32.xlu0 %v610, 64
    %v613 = vpop.permute.xlu0 %612
    %v615 = vadd.f32 %v605, %v613
    %v616 = vtanh.pop %v615
    %618 = vrot.lane.b32.xlu0 %v616, 64
    %v619 = vpop.permute.xlu0 %618
    %v621 = vmul.f32 %v603, %v619
    %623 = vrot.lane.b32.xlu0 %v510, 64
    %v624 = vpop.permute.xlu0 %623
    %v626 = vsel %vm302, %v621, %v624
    %627 = vmatprep.subr.mxu0 %v254
    %628 = vmatpush1.msra.mxu0 %v253
    %629 = vmatprep.subr.mxu0 %v256
    %630 = vmatpush1.msra.mxu0 %v255
    %631 = vmatprep.subr.mxu0 %v258
    %632 = vmatpush1.msra.mxu0 %v257
    %633 = vmatprep.subr.mxu0 %v260
    %634 = vmatpush1.msra.mxu0 %v259
    %635 = vmatprep.subr.mxu0 %v262
    %636 = vmatpush1.msra.mxu0 %v261
    %637 = vmatprep.subr.mxu0 %v264
    %638 = vmatpush1.msra.mxu0 %v263
    %639 = vmatprep.subr.mxu0 %v266
    %640 = vmatpush1.msra.mxu0 %v265
    %641 = vmatprep.subr.mxu0 %v268
    %642 = vmatpush1.msra.mxu0 %v267
    %643 = vmatprep.subr.mxu0 %v270
    %644 = vmatpush1.msra.mxu0 %v269
    %645 = vmatprep.subr.mxu0 %v272
    %646 = vmatpush1.msra.mxu0 %v271
    %647 = vmatprep.subr.mxu0 %v274
    %648 = vmatpush1.msra.mxu0 %v273
    %649 = vmatprep.subr.mxu0 %v276
    %650 = vmatpush1.msra.mxu0 %v275
    %651 = vmatprep.subr.mxu0 %v278
    %652 = vmatpush1.msra.mxu0 %v277
    %653 = vmatprep.subr.mxu0 %v280
    %654 = vmatpush1.msra.mxu0 %v279
    %655 = vmatprep.subr.mxu0 %v282
    %656 = vmatpush1.msra.mxu0 %v281
    %657 = vmatprep.subr.mxu0 %v284
    %658 = vmatpush1.msra.mxu0 %v283
    %659 = vmatprep.subr.mxu0 0.0
    %660 = vmatpush1.msra.mxu0 0.0
    %661 = vmatprep.subr.mxu0 0.0
    %662 = vmatpush1.msra.mxu0 0.0
    %663 = vmatprep.subr.mxu0 0.0
    %664 = vmatpush1.msra.mxu0 0.0
    %665 = vmatprep.subr.mxu0 0.0
    %666 = vmatpush1.msra.mxu0 0.0
    %667 = vmatprep.subr.mxu0 0.0
    %668 = vmatpush1.msra.mxu0 0.0
    %669 = vmatprep.subr.mxu0 0.0
    %670 = vmatpush1.msra.mxu0 0.0
    %671 = vmatprep.subr.mxu0 0.0
    %672 = vmatpush1.msra.mxu0 0.0
    %673 = vmatprep.subr.mxu0 0.0
    %674 = vmatpush1.msra.mxu0 0.0
    %675 = vmatprep.subr.mxu0 0.0
    %676 = vmatpush1.msra.mxu0 0.0
    %677 = vmatprep.subr.mxu0 0.0
    %678 = vmatpush1.msra.mxu0 0.0
    %679 = vmatprep.subr.mxu0 0.0
    %680 = vmatpush1.msra.mxu0 0.0
    %681 = vmatprep.subr.mxu0 0.0
    %682 = vmatpush1.msra.mxu0 0.0
    %683 = vmatprep.subr.mxu0 0.0
    %684 = vmatpush1.msra.mxu0 0.0
    %685 = vmatprep.subr.mxu0 0.0
    %686 = vmatpush1.msra.mxu0 0.0
    %687 = vmatprep.subr.mxu0 0.0
    %688 = vmatpush1.msra.mxu0 0.0
    %689 = vmatprep.subr.mxu0 0.0
    %690 = vmatpush1.msra.mxu0 0.0
    %691 = vmatprep.mubr.f32.mxu0 0.0
    %692 = vmatmul.mubr.f32.gmra.mrb[0].mxu0 %v626
    %v693 = vpop.f32.mrb[0].mxu0
    %v694 = vadd.f32 %v290, %v693
    %v695 = vpop.f32.mrb[0].mxu0
    %v696 = vadd.f32 %v294, %v695
    %697 = vdwg.mxu0
    %v698 = vxor.u32 %v694, 2147483648
    %v699 = vxor.u32 %v696, 2147483648
    %v700 = vmul.f32 %v698, 1.442695
    %v701 = vpow.pop %v700
    %v702 = vmul.f32 %v699, 1.442695
    %v703 = vpow.pop %v702
    %v704 = vadd.f32 %v701, 1.0
    %v705 = vadd.f32 %v703, 1.0
    %v706 = vrcp.pop %v704
    %v707 = vmul.f32 1.0, %v706
    %v708 = vrcp.pop %v705
    %v709 = vmul.f32 1.0, %v708
    %v710 = vtanh.pop %v696
    %v711 = vmul.f32 %v707, %v504
    %713 = vrot.lane.b32.xlu0 %v710, 64
    %v714 = vpop.permute.xlu0 %713
    %v716 = vmul.f32 %v707, %v714
    %718 = vrot.lane.b32.xlu0 %v716, 64
    %v719 = vpop.permute.xlu0 %718
    %v721 = vadd.f32 %v711, %v719
    %v722 = vtanh.pop %v721
    %724 = vrot.lane.b32.xlu0 %v722, 64
    %v725 = vpop.permute.xlu0 %724
    %v727 = vmul.f32 %v709, %v725
    %s728 = smul.u32 2, 2
    %s729 = smul.addr %s728, 8
    %s730 = scalar_lea.vmem [#allocation2], %s729
    %v731 = vld [vmem:[%s730] sm:$0xff]
    %v732 = vld [vmem:[%s730 + $0x8] sm:$0xff]
    %v734 = vsel %vm302, %v621, 0
    %736 = vmatprep.subr.mxu0 %v238
    %737 = vmatpush1.msra.mxu0 %v237
    %738 = vmatprep.subr.mxu0 %v240
    %739 = vmatpush1.msra.mxu0 %v239
    %740 = vmatprep.subr.mxu0 %v242
    %741 = vmatpush1.msra.mxu0 %v241
    %742 = vmatprep.subr.mxu0 %v244
    %743 = vmatpush1.msra.mxu0 %v243
    %744 = vmatprep.subr.mxu0 %v246
    %745 = vmatpush1.msra.mxu0 %v245
    %746 = vmatprep.subr.mxu0 %v248
    %747 = vmatpush1.msra.mxu0 %v247
    %748 = vmatprep.subr.mxu0 %v250
    %749 = vmatpush1.msra.mxu0 %v249
    %750 = vmatprep.subr.mxu0 %v252
    %751 = vmatpush1.msra.mxu0 %v251
    %752 = vmatprep.subr.mxu0 0.0
    %753 = vmatpush1.msra.mxu0 0.0
    %754 = vmatprep.subr.mxu0 0.0
    %755 = vmatpush1.msra.mxu0 0.0
    %756 = vmatprep.subr.mxu0 0.0
    %757 = vmatpush1.msra.mxu0 0.0
    %758 = vmatprep.subr.mxu0 0.0
    %759 = vmatpush1.msra.mxu0 0.0
    %760 = vmatprep.subr.mxu0 0.0
    %761 = vmatpush1.msra.mxu0 0.0
    %762 = vmatprep.subr.mxu0 0.0
    %763 = vmatpush1.msra.mxu0 0.0
    %764 = vmatprep.subr.mxu0 0.0
    %765 = vmatpush1.msra.mxu0 0.0
    %766 = vmatprep.subr.mxu0 0.0
    %767 = vmatpush1.msra.mxu0 0.0
    %768 = vmatprep.subr.mxu0 0.0
    %769 = vmatpush1.msra.mxu0 0.0
    %770 = vmatprep.subr.mxu0 0.0
    %771 = vmatpush1.msra.mxu0 0.0
    %772 = vmatprep.subr.mxu0 0.0
    %773 = vmatpush1.msra.mxu0 0.0
    %774 = vmatprep.subr.mxu0 0.0
    %775 = vmatpush1.msra.mxu0 0.0
    %776 = vmatprep.subr.mxu0 0.0
    %777 = vmatpush1.msra.mxu0 0.0
    %778 = vmatprep.subr.mxu0 0.0
    %779 = vmatpush1.msra.mxu0 0.0
    %780 = vmatprep.subr.mxu0 0.0
    %781 = vmatpush1.msra.mxu0 0.0
    %782 = vmatprep.subr.mxu0 0.0
    %783 = vmatpush1.msra.mxu0 0.0
    %784 = vmatprep.subr.mxu0 0.0
    %785 = vmatpush1.msra.mxu0 0.0
    %786 = vmatprep.subr.mxu0 0.0
    %787 = vmatpush1.msra.mxu0 0.0
    %788 = vmatprep.subr.mxu0 0.0
    %789 = vmatpush1.msra.mxu0 0.0
    %790 = vmatprep.subr.mxu0 0.0
    %791 = vmatpush1.msra.mxu0 0.0
    %792 = vmatprep.subr.mxu0 0.0
    %793 = vmatpush1.msra.mxu0 0.0
    %794 = vmatprep.subr.mxu0 0.0
    %795 = vmatpush1.msra.mxu0 0.0
    %796 = vmatprep.subr.mxu0 0.0
    %797 = vmatpush1.msra.mxu0 0.0
    %798 = vmatprep.subr.mxu0 0.0
    %799 = vmatpush1.msra.mxu0 0.0
    %800 = vmatprep.mubr.f32.mxu0 0.0
    %801 = vmatmul.mubr.f32.gmra.mrb[0].mxu0 %v734
    %v802 = vpop.f32.mrb[0].mxu0
    %v803 = vadd.f32 0.0, %v802
    %v804 = vpop.f32.mrb[0].mxu0
    %v805 = vadd.f32 0.0, %v804
    %806 = vdwg.mxu0
    %v807 = vadd.f32 %v731, %v803
    %v808 = vadd.f32 %v732, %v805
    %v809 = vxor.u32 %v807, 2147483648
    %v810 = vxor.u32 %v808, 2147483648
    %v811 = vmul.f32 %v809, 1.442695
    %v812 = vpow.pop %v811
    %v813 = vmul.f32 %v810, 1.442695
    %v814 = vpow.pop %v813
    %v815 = vadd.f32 %v812, 1.0
    %v816 = vadd.f32 %v814, 1.0
    %v817 = vrcp.pop %v815
    %v818 = vmul.f32 1.0, %v817
    %v819 = vrcp.pop %v816
    %v820 = vmul.f32 1.0, %v819
    %v821 = vtanh.pop %v808
    %v822 = vmul.f32 %v818, %v615
    %824 = vrot.lane.b32.xlu0 %v821, 64
    %v825 = vpop.permute.xlu0 %824
    %v827 = vmul.f32 %v818, %v825
    %829 = vrot.lane.b32.xlu0 %v827, 64
    %v830 = vpop.permute.xlu0 %829
    %v832 = vadd.f32 %v822, %v830
    %v833 = vtanh.pop %v832
    %835 = vrot.lane.b32.xlu0 %v833, 64
    %v836 = vpop.permute.xlu0 %835
    %v838 = vmul.f32 %v820, %v836
    %840 = vrot.lane.b32.xlu0 %v727, 64
    %v841 = vpop.permute.xlu0 %840
    %v843 = vsel %vm302, %v838, %v841
    %844 = vmatprep.subr.mxu0 %v254
    %845 = vmatpush1.msra.mxu0 %v253
    %846 = vmatprep.subr.mxu0 %v256
    %847 = vmatpush1.msra.mxu0 %v255
    %848 = vmatprep.subr.mxu0 %v258
    %849 = vmatpush1.msra.mxu0 %v257
    %850 = vmatprep.subr.mxu0 %v260
    %851 = vmatpush1.msra.mxu0 %v259
    %852 = vmatprep.subr.mxu0 %v262
    %853 = vmatpush1.msra.mxu0 %v261
    %854 = vmatprep.subr.mxu0 %v264
    %855 = vmatpush1.msra.mxu0 %v263
    %856 = vmatprep.subr.mxu0 %v266
    %857 = vmatpush1.msra.mxu0 %v265
    %858 = vmatprep.subr.mxu0 %v268
    %859 = vmatpush1.msra.mxu0 %v267
    %860 = vmatprep.subr.mxu0 %v270
    %861 = vmatpush1.msra.mxu0 %v269
    %862 = vmatprep.subr.mxu0 %v272
    %863 = vmatpush1.msra.mxu0 %v271
    %864 = vmatprep.subr.mxu0 %v274
    %865 = vmatpush1.msra.mxu0 %v273
    %866 = vmatprep.subr.mxu0 %v276
    %867 = vmatpush1.msra.mxu0 %v275
    %868 = vmatprep.subr.mxu0 %v278
    %869 = vmatpush1.msra.mxu0 %v277
    %870 = vmatprep.subr.mxu0 %v280
    %871 = vmatpush1.msra.mxu0 %v279
    %872 = vmatprep.subr.mxu0 %v282
    %873 = vmatpush1.msra.mxu0 %v281
    %874 = vmatprep.subr.mxu0 %v284
    %875 = vmatpush1.msra.mxu0 %v283
    %876 = vmatprep.subr.mxu0 0.0
    %877 = vmatpush1.msra.mxu0 0.0
    %878 = vmatprep.subr.mxu0 0.0
    %879 = vmatpush1.msra.mxu0 0.0
    %880 = vmatprep.subr.mxu0 0.0
    %881 = vmatpush1.msra.mxu0 0.0
    %882 = vmatprep.subr.mxu0 0.0
    %883 = vmatpush1.msra.mxu0 0.0
    %884 = vmatprep.subr.mxu0 0.0
    %885 = vmatpush1.msra.mxu0 0.0
    %886 = vmatprep.subr.mxu0 0.0
    %887 = vmatpush1.msra.mxu0 0.0
    %888 = vmatprep.subr.mxu0 0.0
    %889 = vmatpush1.msra.mxu0 0.0
    %890 = vmatprep.subr.mxu0 0.0
    %891 = vmatpush1.msra.mxu0 0.0
    %892 = vmatprep.subr.mxu0 0.0
    %893 = vmatpush1.msra.mxu0 0.0
    %894 = vmatprep.subr.mxu0 0.0
    %895 = vmatpush1.msra.mxu0 0.0
    %896 = vmatprep.subr.mxu0 0.0
    %897 = vmatpush1.msra.mxu0 0.0
    %898 = vmatprep.subr.mxu0 0.0
    %899 = vmatpush1.msra.mxu0 0.0
    %900 = vmatprep.subr.mxu0 0.0
    %901 = vmatpush1.msra.mxu0 0.0
    %902 = vmatprep.subr.mxu0 0.0
    %903 = vmatpush1.msra.mxu0 0.0
    %904 = vmatprep.subr.mxu0 0.0
    %905 = vmatpush1.msra.mxu0 0.0
    %906 = vmatprep.subr.mxu0 0.0
    %907 = vmatpush1.msra.mxu0 0.0
    %908 = vmatprep.mubr.f32.mxu0 0.0
    %909 = vmatmul.mubr.f32.gmra.mrb[0].mxu0 %v843
    %v910 = vpop.f32.mrb[0].mxu0
    %v911 = vadd.f32 %v290, %v910
    %v912 = vpop.f32.mrb[0].mxu0
    %v913 = vadd.f32 %v294, %v912
    %914 = vdwg.mxu0
    %v915 = vxor.u32 %v911, 2147483648
    %v916 = vxor.u32 %v913, 2147483648
    %v917 = vmul.f32 %v915, 1.442695
    %v918 = vpow.pop %v917
    %v919 = vmul.f32 %v916, 1.442695
    %v920 = vpow.pop %v919
    %v921 = vadd.f32 %v918, 1.0
    %v922 = vadd.f32 %v920, 1.0
    %v923 = vrcp.pop %v921
    %v924 = vmul.f32 1.0, %v923
    %v925 = vrcp.pop %v922
    %v926 = vmul.f32 1.0, %v925
    %v927 = vtanh.pop %v913
    %v928 = vmul.f32 %v924, %v721
    %930 = vrot.lane.b32.xlu0 %v927, 64
    %v931 = vpop.permute.xlu0 %930
    %v933 = vmul.f32 %v924, %v931
    %935 = vrot.lane.b32.xlu0 %v933, 64
    %v936 = vpop.permute.xlu0 %935
    %v938 = vadd.f32 %v928, %v936
    %v939 = vtanh.pop %v938
    %941 = vrot.lane.b32.xlu0 %v939, 64
    %v942 = vpop.permute.xlu0 %941
    %v944 = vmul.f32 %v926, %v942
    %s945 = smul.u32 3, 2
    %s946 = smul.addr %s945, 8
    %s947 = scalar_lea.vmem [#allocation2], %s946
    %v948 = vld [vmem:[%s947] sm:$0xff]
    %v949 = vld [vmem:[%s947 + $0x8] sm:$0xff]
    %v951 = vsel %vm302, %v838, 0
    %953 = vmatprep.subr.mxu0 %v238
    %954 = vmatpush1.msra.mxu0 %v237
    %955 = vmatprep.subr.mxu0 %v240
    %956 = vmatpush1.msra.mxu0 %v239
    %957 = vmatprep.subr.mxu0 %v242
    %958 = vmatpush1.msra.mxu0 %v241
    %959 = vmatprep.subr.mxu0 %v244
    %960 = vmatpush1.msra.mxu0 %v243
    %961 = vmatprep.subr.mxu0 %v246
    %962 = vmatpush1.msra.mxu0 %v245
    %963 = vmatprep.subr.mxu0 %v248
    %964 = vmatpush1.msra.mxu0 %v247
    %965 = vmatprep.subr.mxu0 %v250
    %966 = vmatpush1.msra.mxu0 %v249
    %967 = vmatprep.subr.mxu0 %v252
    %968 = vmatpush1.msra.mxu0 %v251
    %969 = vmatprep.subr.mxu0 0.0
    %970 = vmatpush1.msra.mxu0 0.0
    %971 = vmatprep.subr.mxu0 0.0
    %972 = vmatpush1.msra.mxu0 0.0
    %973 = vmatprep.subr.mxu0 0.0
    %974 = vmatpush1.msra.mxu0 0.0
    %975 = vmatprep.subr.mxu0 0.0
    %976 = vmatpush1.msra.mxu0 0.0
    %977 = vmatprep.subr.mxu0 0.0
    %978 = vmatpush1.msra.mxu0 0.0
    %979 = vmatprep.subr.mxu0 0.0
    %980 = vmatpush1.msra.mxu0 0.0
    %981 = vmatprep.subr.mxu0 0.0
    %982 = vmatpush1.msra.mxu0 0.0
    %983 = vmatprep.subr.mxu0 0.0
    %984 = vmatpush1.msra.mxu0 0.0
    %985 = vmatprep.subr.mxu0 0.0
    %986 = vmatpush1.msra.mxu0 0.0
    %987 = vmatprep.subr.mxu0 0.0
    %988 = vmatpush1.msra.mxu0 0.0
    %989 = vmatprep.subr.mxu0 0.0
    %990 = vmatpush1.msra.mxu0 0.0
    %991 = vmatprep.subr.mxu0 0.0
    %992 = vmatpush1.msra.mxu0 0.0
    %993 = vmatprep.subr.mxu0 0.0
    %994 = vmatpush1.msra.mxu0 0.0
    %995 = vmatprep.subr.mxu0 0.0
    %996 = vmatpush1.msra.mxu0 0.0
    %997 = vmatprep.subr.mxu0 0.0
    %998 = vmatpush1.msra.mxu0 0.0
    %999 = vmatprep.subr.mxu0 0.0
    %1000 = vmatpush1.msra.mxu0 0.0
    %1001 = vmatprep.subr.mxu0 0.0
    %1002 = vmatpush1.msra.mxu0 0.0
    %1003 = vmatprep.subr.mxu0 0.0
    %1004 = vmatpush1.msra.mxu0 0.0
    %1005 = vmatprep.subr.mxu0 0.0
    %1006 = vmatpush1.msra.mxu0 0.0
    %1007 = vmatprep.subr.mxu0 0.0
    %1008 = vmatpush1.msra.mxu0 0.0
    %1009 = vmatprep.subr.mxu0 0.0
    %1010 = vmatpush1.msra.mxu0 0.0
    %1011 = vmatprep.subr.mxu0 0.0
    %1012 = vmatpush1.msra.mxu0 0.0
    %1013 = vmatprep.subr.mxu0 0.0
    %1014 = vmatpush1.msra.mxu0 0.0
    %1015 = vmatprep.subr.mxu0 0.0
    %1016 = vmatpush1.msra.mxu0 0.0
    %1017 = vmatprep.mubr.f32.mxu0 0.0
    %1018 = vmatmul.mubr.f32.gmra.mrb[0].mxu0 %v951
    %v1019 = vpop.f32.mrb[0].mxu0
    %v1020 = vadd.f32 0.0, %v1019
    %v1021 = vpop.f32.mrb[0].mxu0
    %v1022 = vadd.f32 0.0, %v1021
    %1023 = vdwg.mxu0
    %v1024 = vadd.f32 %v948, %v1020
    %v1025 = vadd.f32 %v949, %v1022
    %v1026 = vxor.u32 %v1024, 2147483648
    %v1027 = vxor.u32 %v1025, 2147483648
    %v1028 = vmul.f32 %v1026, 1.442695
    %v1029 = vpow.pop %v1028
    %v1030 = vmul.f32 %v1027, 1.442695
    %v1031 = vpow.pop %v1030
    %v1032 = vadd.f32 %v1029, 1.0
    %v1033 = vadd.f32 %v1031, 1.0
    %v1034 = vrcp.pop %v1032
    %v1035 = vmul.f32 1.0, %v1034
    %v1036 = vrcp.pop %v1033
    %v1037 = vmul.f32 1.0, %v1036
    %v1038 = vtanh.pop %v1025
    %v1039 = vmul.f32 %v1035, %v832
    %1041 = vrot.lane.b32.xlu0 %v1038, 64
    %v1042 = vpop.permute.xlu0 %1041
    %v1044 = vmul.f32 %v1035, %v1042
    %1046 = vrot.lane.b32.xlu0 %v1044, 64
    %v1047 = vpop.permute.xlu0 %1046
    %v1049 = vadd.f32 %v1039, %v1047
    %v1050 = vtanh.pop %v1049
    %1052 = vrot.lane.b32.xlu0 %v1050, 64
    %v1053 = vpop.permute.xlu0 %1052
    %v1055 = vmul.f32 %v1037, %v1053
    %1057 = vrot.lane.b32.xlu0 %v944, 64
    %v1058 = vpop.permute.xlu0 %1057
    %v1060 = vsel %vm302, %v1055, %v1058
    %1061 = vmatprep.subr.mxu0 %v254
    %1062 = vmatpush1.msra.mxu0 %v253
    %1063 = vmatprep.subr.mxu0 %v256
    %1064 = vmatpush1.msra.mxu0 %v255
    %1065 = vmatprep.subr.mxu0 %v258
    %1066 = vmatpush1.msra.mxu0 %v257
    %1067 = vmatprep.subr.mxu0 %v260
    %1068 = vmatpush1.msra.mxu0 %v259
    %1069 = vmatprep.subr.mxu0 %v262
    %1070 = vmatpush1.msra.mxu0 %v261
    %1071 = vmatprep.subr.mxu0 %v264
    %1072 = vmatpush1.msra.mxu0 %v263
    %1073 = vmatprep.subr.mxu0 %v266
    %1074 = vmatpush1.msra.mxu0 %v265
    %1075 = vmatprep.subr.mxu0 %v268
    %1076 = vmatpush1.msra.mxu0 %v267
    %1077 = vmatprep.subr.mxu0 %v270
    %1078 = vmatpush1.msra.mxu0 %v269
    %1079 = vmatprep.subr.mxu0 %v272
    %1080 = vmatpush1.msra.mxu0 %v271
    %1081 = vmatprep.subr.mxu0 %v274
    %1082 = vmatpush1.msra.mxu0 %v273
    %1083 = vmatprep.subr.mxu0 %v276
    %1084 = vmatpush1.msra.mxu0 %v275
    %1085 = vmatprep.subr.mxu0 %v278
    %1086 = vmatpush1.msra.mxu0 %v277
    %1087 = vmatprep.subr.mxu0 %v280
    %1088 = vmatpush1.msra.mxu0 %v279
    %1089 = vmatprep.subr.mxu0 %v282
    %1090 = vmatpush1.msra.mxu0 %v281
    %1091 = vmatprep.subr.mxu0 %v284
    %1092 = vmatpush1.msra.mxu0 %v283
    %1093 = vmatprep.subr.mxu0 0.0
    %1094 = vmatpush1.msra.mxu0 0.0
    %1095 = vmatprep.subr.mxu0 0.0
    %1096 = vmatpush1.msra.mxu0 0.0
    %1097 = vmatprep.subr.mxu0 0.0
    %1098 = vmatpush1.msra.mxu0 0.0
    %1099 = vmatprep.subr.mxu0 0.0
    %1100 = vmatpush1.msra.mxu0 0.0
    %1101 = vmatprep.subr.mxu0 0.0
    %1102 = vmatpush1.msra.mxu0 0.0
    %1103 = vmatprep.subr.mxu0 0.0
    %1104 = vmatpush1.msra.mxu0 0.0
    %1105 = vmatprep.subr.mxu0 0.0
    %1106 = vmatpush1.msra.mxu0 0.0
    %1107 = vmatprep.subr.mxu0 0.0
    %1108 = vmatpush1.msra.mxu0 0.0
    %1109 = vmatprep.subr.mxu0 0.0
    %1110 = vmatpush1.msra.mxu0 0.0
    %1111 = vmatprep.subr.mxu0 0.0
    %1112 = vmatpush1.msra.mxu0 0.0
    %1113 = vmatprep.subr.mxu0 0.0
    %1114 = vmatpush1.msra.mxu0 0.0
    %1115 = vmatprep.subr.mxu0 0.0
    %1116 = vmatpush1.msra.mxu0 0.0
    %1117 = vmatprep.subr.mxu0 0.0
    %1118 = vmatpush1.msra.mxu0 0.0
    %1119 = vmatprep.subr.mxu0 0.0
    %1120 = vmatpush1.msra.mxu0 0.0
    %1121 = vmatprep.subr.mxu0 0.0
    %1122 = vmatpush1.msra.mxu0 0.0
    %1123 = vmatprep.subr.mxu0 0.0
    %1124 = vmatpush1.msra.mxu0 0.0
    %1125 = vmatprep.mubr.f32.mxu0 0.0
    %1126 = vmatmul.mubr.f32.gmra.mrb[0].mxu0 %v1060
    %v1127 = vpop.f32.mrb[0].mxu0
    %v1128 = vadd.f32 %v290, %v1127
    %v1129 = vpop.f32.mrb[0].mxu0
    %v1130 = vadd.f32 %v294, %v1129
    %1131 = vdwg.mxu0
    %v1132 = vxor.u32 %v1128, 2147483648
    %v1133 = vxor.u32 %v1130, 2147483648
    %v1134 = vmul.f32 %v1132, 1.442695
    %v1135 = vpow.pop %v1134
    %v1136 = vmul.f32 %v1133, 1.442695
    %v1137 = vpow.pop %v1136
    %v1138 = vadd.f32 %v1135, 1.0
    %v1139 = vadd.f32 %v1137, 1.0
    %v1140 = vrcp.pop %v1138
    %v1141 = vmul.f32 1.0, %v1140
    %v1142 = vrcp.pop %v1139
    %v1143 = vmul.f32 1.0, %v1142
    %v1144 = vtanh.pop %v1130
    %v1145 = vmul.f32 %v1141, %v938
    %1147 = vrot.lane.b32.xlu0 %v1144, 64
    %v1148 = vpop.permute.xlu0 %1147
    %v1150 = vmul.f32 %v1141, %v1148
    %1152 = vrot.lane.b32.xlu0 %v1150, 64
    %v1153 = vpop.permute.xlu0 %1152
    %v1155 = vadd.f32 %v1145, %v1153
    %v1156 = vtanh.pop %v1155
    %1158 = vrot.lane.b32.xlu0 %v1156, 64
    %v1159 = vpop.permute.xlu0 %1158
    %v1161 = vmul.f32 %v1143, %v1159
    %s1162 = smul.u32 4, 2
    %s1163 = smul.addr %s1162, 8
    %s1164 = scalar_lea.vmem [#allocation2], %s1163
    %v1165 = vld [vmem:[%s1164] sm:$0xff]
    %v1166 = vld [vmem:[%s1164 + $0x8] sm:$0xff]
    %v1168 = vsel %vm302, %v1055, 0
    %1170 = vmatprep.subr.mxu0 %v238
    %1171 = vmatpush1.msra.mxu0 %v237
    %1172 = vmatprep.subr.mxu0 %v240
    %1173 = vmatpush1.msra.mxu0 %v239
    %1174 = vmatprep.subr.mxu0 %v242
    %1175 = vmatpush1.msra.mxu0 %v241
    %1176 = vmatprep.subr.mxu0 %v244
    %1177 = vmatpush1.msra.mxu0 %v243
    %1178 = vmatprep.subr.mxu0 %v246
    %1179 = vmatpush1.msra.mxu0 %v245
    %1180 = vmatprep.subr.mxu0 %v248
    %1181 = vmatpush1.msra.mxu0 %v247
    %1182 = vmatprep.subr.mxu0 %v250
    %1183 = vmatpush1.msra.mxu0 %v249
    %1184 = vmatprep.subr.mxu0 %v252
    %1185 = vmatpush1.msra.mxu0 %v251
    %1186 = vmatprep.subr.mxu0 0.0
    %1187 = vmatpush1.msra.mxu0 0.0
    %1188 = vmatprep.subr.mxu0 0.0
    %1189 = vmatpush1.msra.mxu0 0.0
    %1190 = vmatprep.subr.mxu0 0.0
    %1191 = vmatpush1.msra.mxu0 0.0
    %1192 = vmatprep.subr.mxu0 0.0
    %1193 = vmatpush1.msra.mxu0 0.0
    %1194 = vmatprep.subr.mxu0 0.0
    %1195 = vmatpush1.msra.mxu0 0.0
    %1196 = vmatprep.subr.mxu0 0.0
    %1197 = vmatpush1.msra.mxu0 0.0
    %1198 = vmatprep.subr.mxu0 0.0
    %1199 = vmatpush1.msra.mxu0 0.0
    %1200 = vmatprep.subr.mxu0 0.0
    %1201 = vmatpush1.msra.mxu0 0.0
    %1202 = vmatprep.subr.mxu0 0.0
    %1203 = vmatpush1.msra.mxu0 0.0
    %1204 = vmatprep.subr.mxu0 0.0
    %1205 = vmatpush1.msra.mxu0 0.0
    %1206 = vmatprep.subr.mxu0 0.0
    %1207 = vmatpush1.msra.mxu0 0.0
    %1208 = vmatprep.subr.mxu0 0.0
    %1209 = vmatpush1.msra.mxu0 0.0
    %1210 = vmatprep.subr.mxu0 0.0
    %1211 = vmatpush1.msra.mxu0 0.0
    %1212 = vmatprep.subr.mxu0 0.0
    %1213 = vmatpush1.msra.mxu0 0.0
    %1214 = vmatprep.subr.mxu0 0.0
    %1215 = vmatpush1.msra.mxu0 0.0
    %1216 = vmatprep.subr.mxu0 0.0
    %1217 = vmatpush1.msra.mxu0 0.0
    %1218 = vmatprep.subr.mxu0 0.0
    %1219 = vmatpush1.msra.mxu0 0.0
    %1220 = vmatprep.subr.mxu0 0.0
    %1221 = vmatpush1.msra.mxu0 0.0
    %1222 = vmatprep.subr.mxu0 0.0
    %1223 = vmatpush1.msra.mxu0 0.0
    %1224 = vmatprep.subr.mxu0 0.0
    %1225 = vmatpush1.msra.mxu0 0.0
    %1226 = vmatprep.subr.mxu0 0.0
    %1227 = vmatpush1.msra.mxu0 0.0
    %1228 = vmatprep.subr.mxu0 0.0
    %1229 = vmatpush1.msra.mxu0 0.0
    %1230 = vmatprep.subr.mxu0 0.0
    %1231 = vmatpush1.msra.mxu0 0.0
    %1232 = vmatprep.subr.mxu0 0.0
    %1233 = vmatpush1.msra.mxu0 0.0
    %1234 = vmatprep.mubr.f32.mxu0 0.0
    %1235 = vmatmul.mubr.f32.gmra.mrb[0].mxu0 %v1168
    %v1236 = vpop.f32.mrb[0].mxu0
    %v1237 = vadd.f32 0.0, %v1236
    %v1238 = vpop.f32.mrb[0].mxu0
    %v1239 = vadd.f32 0.0, %v1238
    %1240 = vdwg.mxu0
    %v1241 = vadd.f32 %v1165, %v1237
    %v1242 = vadd.f32 %v1166, %v1239
    %v1243 = vxor.u32 %v1241, 2147483648
    %v1244 = vxor.u32 %v1242, 2147483648
    %v1245 = vmul.f32 %v1243, 1.442695
    %v1246 = vpow.pop %v1245
    %v1247 = vmul.f32 %v1244, 1.442695
    %v1248 = vpow.pop %v1247
    %v1249 = vadd.f32 %v1246, 1.0
    %v1250 = vadd.f32 %v1248, 1.0
    %v1251 = vrcp.pop %v1249
    %v1252 = vmul.f32 1.0, %v1251
    %v1253 = vrcp.pop %v1250
    %v1254 = vmul.f32 1.0, %v1253
    %v1255 = vtanh.pop %v1242
    %v1256 = vmul.f32 %v1252, %v1049
    %1258 = vrot.lane.b32.xlu0 %v1255, 64
    %v1259 = vpop.permute.xlu0 %1258
    %v1261 = vmul.f32 %v1252, %v1259
    %1263 = vrot.lane.b32.xlu0 %v1261, 64
    %v1264 = vpop.permute.xlu0 %1263
    %v1266 = vadd.f32 %v1256, %v1264
    %v1267 = vtanh.pop %v1266
    %1269 = vrot.lane.b32.xlu0 %v1267, 64
    %v1270 = vpop.permute.xlu0 %1269
    %v1272 = vmul.f32 %v1254, %v1270
    %1274 = vrot.lane.b32.xlu0 %v1161, 64
    %v1275 = vpop.permute.xlu0 %1274
    %v1277 = vsel %vm302, %v1272, %v1275
    %1278 = vmatprep.subr.mxu0 %v254
    %1279 = vmatpush1.msra.mxu0 %v253
    %1280 = vmatprep.subr.mxu0 %v256
    %1281 = vmatpush1.msra.mxu0 %v255
    %1282 = vmatprep.subr.mxu0 %v258
    %1283 = vmatpush1.msra.mxu0 %v257
    %1284 = vmatprep.subr.mxu0 %v260
    %1285 = vmatpush1.msra.mxu0 %v259
    %1286 = vmatprep.subr.mxu0 %v262
    %1287 = vmatpush1.msra.mxu0 %v261
    %1288 = vmatprep.subr.mxu0 %v264
    %1289 = vmatpush1.msra.mxu0 %v263
    %1290 = vmatprep.subr.mxu0 %v266
    %1291 = vmatpush1.msra.mxu0 %v265
    %1292 = vmatprep.subr.mxu0 %v268
    %1293 = vmatpush1.msra.mxu0 %v267
    %1294 = vmatprep.subr.mxu0 %v270
    %1295 = vmatpush1.msra.mxu0 %v269
    %1296 = vmatprep.subr.mxu0 %v272
    %1297 = vmatpush1.msra.mxu0 %v271
    %1298 = vmatprep.subr.mxu0 %v274
    %1299 = vmatpush1.msra.mxu0 %v273
    %1300 = vmatprep.subr.mxu0 %v276
    %1301 = vmatpush1.msra.mxu0 %v275
    %1302 = vmatprep.subr.mxu0 %v278
    %1303 = vmatpush1.msra.mxu0 %v277
    %1304 = vmatprep.subr.mxu0 %v280
    %1305 = vmatpush1.msra.mxu0 %v279
    %1306 = vmatprep.subr.mxu0 %v282
    %1307 = vmatpush1.msra.mxu0 %v281
    %1308 = vmatprep.subr.mxu0 %v284
    %1309 = vmatpush1.msra.mxu0 %v283
    %1310 = vmatprep.subr.mxu0 0.0
    %1311 = vmatpush1.msra.mxu0 0.0
    %1312 = vmatprep.subr.mxu0 0.0
    %1313 = vmatpush1.msra.mxu0 0.0
    %1314 = vmatprep.subr.mxu0 0.0
    %1315 = vmatpush1.msra.mxu0 0.0
    %1316 = vmatprep.subr.mxu0 0.0
    %1317 = vmatpush1.msra.mxu0 0.0
    %1318 = vmatprep.subr.mxu0 0.0
    %1319 = vmatpush1.msra.mxu0 0.0
    %1320 = vmatprep.subr.mxu0 0.0
    %1321 = vmatpush1.msra.mxu0 0.0
    %1322 = vmatprep.subr.mxu0 0.0
    %1323 = vmatpush1.msra.mxu0 0.0
    %1324 = vmatprep.subr.mxu0 0.0
    %1325 = vmatpush1.msra.mxu0 0.0
    %1326 = vmatprep.subr.mxu0 0.0
    %1327 = vmatpush1.msra.mxu0 0.0
    %1328 = vmatprep.subr.mxu0 0.0
    %1329 = vmatpush1.msra.mxu0 0.0
    %1330 = vmatprep.subr.mxu0 0.0
    %1331 = vmatpush1.msra.mxu0 0.0
    %1332 = vmatprep.subr.mxu0 0.0
    %1333 = vmatpush1.msra.mxu0 0.0
    %1334 = vmatprep.subr.mxu0 0.0
    %1335 = vmatpush1.msra.mxu0 0.0
    %1336 = vmatprep.subr.mxu0 0.0
    %1337 = vmatpush1.msra.mxu0 0.0
    %1338 = vmatprep.subr.mxu0 0.0
    %1339 = vmatpush1.msra.mxu0 0.0
    %1340 = vmatprep.subr.mxu0 0.0
    %1341 = vmatpush1.msra.mxu0 0.0
    %1342 = vmatprep.mubr.f32.mxu0 0.0
    %1343 = vmatmul.mubr.f32.gmra.mrb[0].mxu0 %v1277
    %v1344 = vpop.f32.mrb[0].mxu0
    %v1345 = vadd.f32 %v290, %v1344
    %v1346 = vpop.f32.mrb[0].mxu0
    %v1347 = vadd.f32 %v294, %v1346
    %1348 = vdwg.mxu0
    %v1349 = vxor.u32 %v1345, 2147483648
    %v1350 = vxor.u32 %v1347, 2147483648
    %v1351 = vmul.f32 %v1349, 1.442695
    %v1352 = vpow.pop %v1351
    %v1353 = vmul.f32 %v1350, 1.442695
    %v1354 = vpow.pop %v1353
    %v1355 = vadd.f32 %v1352, 1.0
    %v1356 = vadd.f32 %v1354, 1.0
    %v1357 = vrcp.pop %v1355
    %v1358 = vmul.f32 1.0, %v1357
    %v1359 = vrcp.pop %v1356
    %v1360 = vmul.f32 1.0, %v1359
    %v1361 = vtanh.pop %v1347
    %v1362 = vmul.f32 %v1358, %v1155
    %1364 = vrot.lane.b32.xlu0 %v1361, 64
    %v1365 = vpop.permute.xlu0 %1364
    %v1367 = vmul.f32 %v1358, %v1365
    %1369 = vrot.lane.b32.xlu0 %v1367, 64
    %v1370 = vpop.permute.xlu0 %1369
    %v1372 = vadd.f32 %v1362, %v1370
    %v1373 = vtanh.pop %v1372
    %1375 = vrot.lane.b32.xlu0 %v1373, 64
    %v1376 = vpop.permute.xlu0 %1375
    %v1378 = vmul.f32 %v1360, %v1376
    %s1379 = smul.u32 5, 2
    %s1380 = smul.addr %s1379, 8
    %s1381 = scalar_lea.vmem [#allocation2], %s1380
    %v1382 = vld [vmem:[%s1381] sm:$0xff]
    %v1383 = vld [vmem:[%s1381 + $0x8] sm:$0xff]
    %v1385 = vsel %vm302, %v1272, 0
    %1387 = vmatprep.subr.mxu0 %v238
    %1388 = vmatpush1.msra.mxu0 %v237
    %1389 = vmatprep.subr.mxu0 %v240
    %1390 = vmatpush1.msra.mxu0 %v239
    %1391 = vmatprep.subr.mxu0 %v242
    %1392 = vmatpush1.msra.mxu0 %v241
    %1393 = vmatprep.subr.mxu0 %v244
    %1394 = vmatpush1.msra.mxu0 %v243
    %1395 = vmatprep.subr.mxu0 %v246
    %1396 = vmatpush1.msra.mxu0 %v245
    %1397 = vmatprep.subr.mxu0 %v248
    %1398 = vmatpush1.msra.mxu0 %v247
    %1399 = vmatprep.subr.mxu0 %v250
    %1400 = vmatpush1.msra.mxu0 %v249
    %1401 = vmatprep.subr.mxu0 %v252
    %1402 = vmatpush1.msra.mxu0 %v251
    %1403 = vmatprep.subr.mxu0 0.0
    %1404 = vmatpush1.msra.mxu0 0.0
    %1405 = vmatprep.subr.mxu0 0.0
    %1406 = vmatpush1.msra.mxu0 0.0
    %1407 = vmatprep.subr.mxu0 0.0
    %1408 = vmatpush1.msra.mxu0 0.0
    %1409 = vmatprep.subr.mxu0 0.0
    %1410 = vmatpush1.msra.mxu0 0.0
    %1411 = vmatprep.subr.mxu0 0.0
    %1412 = vmatpush1.msra.mxu0 0.0
    %1413 = vmatprep.subr.mxu0 0.0
    %1414 = vmatpush1.msra.mxu0 0.0
    %1415 = vmatprep.subr.mxu0 0.0
    %1416 = vmatpush1.msra.mxu0 0.0
    %1417 = vmatprep.subr.mxu0 0.0
    %1418 = vmatpush1.msra.mxu0 0.0
    %1419 = vmatprep.subr.mxu0 0.0
    %1420 = vmatpush1.msra.mxu0 0.0
    %1421 = vmatprep.subr.mxu0 0.0
    %1422 = vmatpush1.msra.mxu0 0.0
    %1423 = vmatprep.subr.mxu0 0.0
    %1424 = vmatpush1.msra.mxu0 0.0
    %1425 = vmatprep.subr.mxu0 0.0
    %1426 = vmatpush1.msra.mxu0 0.0
    %1427 = vmatprep.subr.mxu0 0.0
    %1428 = vmatpush1.msra.mxu0 0.0
    %1429 = vmatprep.subr.mxu0 0.0
    %1430 = vmatpush1.msra.mxu0 0.0
    %1431 = vmatprep.subr.mxu0 0.0
    %1432 = vmatpush1.msra.mxu0 0.0
    %1433 = vmatprep.subr.mxu0 0.0
    %1434 = vmatpush1.msra.mxu0 0.0
    %1435 = vmatprep.subr.mxu0 0.0
    %1436 = vmatpush1.msra.mxu0 0.0
    %1437 = vmatprep.subr.mxu0 0.0
    %1438 = vmatpush1.msra.mxu0 0.0
    %1439 = vmatprep.subr.mxu0 0.0
    %1440 = vmatpush1.msra.mxu0 0.0
    %1441 = vmatprep.subr.mxu0 0.0
    %1442 = vmatpush1.msra.mxu0 0.0
    %1443 = vmatprep.subr.mxu0 0.0
    %1444 = vmatpush1.msra.mxu0 0.0
    %1445 = vmatprep.subr.mxu0 0.0
    %1446 = vmatpush1.msra.mxu0 0.0
    %1447 = vmatprep.subr.mxu0 0.0
    %1448 = vmatpush1.msra.mxu0 0.0
    %1449 = vmatprep.subr.mxu0 0.0
    %1450 = vmatpush1.msra.mxu0 0.0
    %1451 = vmatprep.mubr.f32.mxu0 0.0
    %1452 = vmatmul.mubr.f32.gmra.mrb[0].mxu0 %v1385
    %v1453 = vpop.f32.mrb[0].mxu0
    %v1454 = vadd.f32 0.0, %v1453
    %v1455 = vpop.f32.mrb[0].mxu0
    %v1456 = vadd.f32 0.0, %v1455
    %1457 = vdwg.mxu0
    %v1458 = vadd.f32 %v1382, %v1454
    %v1459 = vadd.f32 %v1383, %v1456
    %v1460 = vxor.u32 %v1458, 2147483648
    %v1461 = vxor.u32 %v1459, 2147483648
    %v1462 = vmul.f32 %v1460, 1.442695
    %v1463 = vpow.pop %v1462
    %v1464 = vmul.f32 %v1461, 1.442695
    %v1465 = vpow.pop %v1464
    %v1466 = vadd.f32 %v1463, 1.0
    %v1467 = vadd.f32 %v1465, 1.0
    %v1468 = vrcp.pop %v1466
    %v1469 = vmul.f32 1.0, %v1468
    %v1470 = vrcp.pop %v1467
    %v1471 = vmul.f32 1.0, %v1470
    %v1472 = vtanh.pop %v1459
    %v1473 = vmul.f32 %v1469, %v1266
    %1475 = vrot.lane.b32.xlu0 %v1472, 64
    %v1476 = vpop.permute.xlu0 %1475
    %v1478 = vmul.f32 %v1469, %v1476
    %1480 = vrot.lane.b32.xlu0 %v1478, 64
    %v1481 = vpop.permute.xlu0 %1480
    %v1483 = vadd.f32 %v1473, %v1481
    %v1484 = vtanh.pop %v1483
    %1486 = vrot.lane.b32.xlu0 %v1484, 64
    %v1487 = vpop.permute.xlu0 %1486
    %v1489 = vmul.f32 %v1471, %v1487
    %1491 = vrot.lane.b32.xlu0 %v1378, 64
    %v1492 = vpop.permute.xlu0 %1491
    %v1494 = vsel %vm302, %v1489, %v1492
    %1495 = vmatprep.subr.mxu0 %v254
    %1496 = vmatpush1.msra.mxu0 %v253
    %1497 = vmatprep.subr.mxu0 %v256
    %1498 = vmatpush1.msra.mxu0 %v255
    %1499 = vmatprep.subr.mxu0 %v258
    %1500 = vmatpush1.msra.mxu0 %v257
    %1501 = vmatprep.subr.mxu0 %v260
    %1502 = vmatpush1.msra.mxu0 %v259
    %1503 = vmatprep.subr.mxu0 %v262
    %1504 = vmatpush1.msra.mxu0 %v261
    %1505 = vmatprep.subr.mxu0 %v264
    %1506 = vmatpush1.msra.mxu0 %v263
    %1507 = vmatprep.subr.mxu0 %v266
    %1508 = vmatpush1.msra.mxu0 %v265
    %1509 = vmatprep.subr.mxu0 %v268
    %1510 = vmatpush1.msra.mxu0 %v267
    %1511 = vmatprep.subr.mxu0 %v270
    %1512 = vmatpush1.msra.mxu0 %v269
    %1513 = vmatprep.subr.mxu0 %v272
    %1514 = vmatpush1.msra.mxu0 %v271
    %1515 = vmatprep.subr.mxu0 %v274
    %1516 = vmatpush1.msra.mxu0 %v273
    %1517 = vmatprep.subr.mxu0 %v276
    %1518 = vmatpush1.msra.mxu0 %v275
    %1519 = vmatprep.subr.mxu0 %v278
    %1520 = vmatpush1.msra.mxu0 %v277
    %1521 = vmatprep.subr.mxu0 %v280
    %1522 = vmatpush1.msra.mxu0 %v279
    %1523 = vmatprep.subr.mxu0 %v282
    %1524 = vmatpush1.msra.mxu0 %v281
    %1525 = vmatprep.subr.mxu0 %v284
    %1526 = vmatpush1.msra.mxu0 %v283
    %1527 = vmatprep.subr.mxu0 0.0
    %1528 = vmatpush1.msra.mxu0 0.0
    %1529 = vmatprep.subr.mxu0 0.0
    %1530 = vmatpush1.msra.mxu0 0.0
    %1531 = vmatprep.subr.mxu0 0.0
    %1532 = vmatpush1.msra.mxu0 0.0
    %1533 = vmatprep.subr.mxu0 0.0
    %1534 = vmatpush1.msra.mxu0 0.0
    %1535 = vmatprep.subr.mxu0 0.0
    %1536 = vmatpush1.msra.mxu0 0.0
    %1537 = vmatprep.subr.mxu0 0.0
    %1538 = vmatpush1.msra.mxu0 0.0
    %1539 = vmatprep.subr.mxu0 0.0
    %1540 = vmatpush1.msra.mxu0 0.0
    %1541 = vmatprep.subr.mxu0 0.0
    %1542 = vmatpush1.msra.mxu0 0.0
    %1543 = vmatprep.subr.mxu0 0.0
    %1544 = vmatpush1.msra.mxu0 0.0
    %1545 = vmatprep.subr.mxu0 0.0
    %1546 = vmatpush1.msra.mxu0 0.0
    %1547 = vmatprep.subr.mxu0 0.0
    %1548 = vmatpush1.msra.mxu0 0.0
    %1549 = vmatprep.subr.mxu0 0.0
    %1550 = vmatpush1.msra.mxu0 0.0
    %1551 = vmatprep.subr.mxu0 0.0
    %1552 = vmatpush1.msra.mxu0 0.0
    %1553 = vmatprep.subr.mxu0 0.0
    %1554 = vmatpush1.msra.mxu0 0.0
    %1555 = vmatprep.subr.mxu0 0.0
    %1556 = vmatpush1.msra.mxu0 0.0
    %1557 = vmatprep.subr.mxu0 0.0
    %1558 = vmatpush1.msra.mxu0 0.0
    %1559 = vmatprep.mubr.f32.mxu0 0.0
    %1560 = vmatmul.mubr.f32.gmra.mrb[0].mxu0 %v1494
    %v1561 = vpop.f32.mrb[0].mxu0
    %v1562 = vadd.f32 %v290, %v1561
    %v1563 = vpop.f32.mrb[0].mxu0
    %v1564 = vadd.f32 %v294, %v1563
    %1565 = vdwg.mxu0
    %v1566 = vxor.u32 %v1562, 2147483648
    %v1567 = vxor.u32 %v1564, 2147483648
    %v1568 = vmul.f32 %v1566, 1.442695
    %v1569 = vpow.pop %v1568
    %v1570 = vmul.f32 %v1567, 1.442695
    %v1571 = vpow.pop %v1570
    %v1572 = vadd.f32 %v1569, 1.0
    %v1573 = vadd.f32 %v1571, 1.0
    %v1574 = vrcp.pop %v1572
    %v1575 = vmul.f32 1.0, %v1574
    %v1576 = vrcp.pop %v1573
    %v1577 = vmul.f32 1.0, %v1576
    %v1578 = vtanh.pop %v1564
    %v1579 = vmul.f32 %v1575, %v1372
    %1581 = vrot.lane.b32.xlu0 %v1578, 64
    %v1582 = vpop.permute.xlu0 %1581
    %v1584 = vmul.f32 %v1575, %v1582
    %1586 = vrot.lane.b32.xlu0 %v1584, 64
    %v1587 = vpop.permute.xlu0 %1586
    %v1589 = vadd.f32 %v1579, %v1587
    %v1590 = vtanh.pop %v1589
    %1592 = vrot.lane.b32.xlu0 %v1590, 64
    %v1593 = vpop.permute.xlu0 %1592
    %v1595 = vmul.f32 %v1577, %v1593
    %s1596 = smul.u32 6, 2
    %s1597 = smul.addr %s1596, 8
    %s1598 = scalar_lea.vmem [#allocation2], %s1597
    %v1599 = vld [vmem:[%s1598] sm:$0xff]
    %v1600 = vld [vmem:[%s1598 + $0x8] sm:$0xff]
    %v1602 = vsel %vm302, %v1489, 0
    %1604 = vmatprep.subr.mxu0 %v238
    %1605 = vmatpush1.msra.mxu0 %v237
    %1606 = vmatprep.subr.mxu0 %v240
    %1607 = vmatpush1.msra.mxu0 %v239
    %1608 = vmatprep.subr.mxu0 %v242
    %1609 = vmatpush1.msra.mxu0 %v241
    %1610 = vmatprep.subr.mxu0 %v244
    %1611 = vmatpush1.msra.mxu0 %v243
    %1612 = vmatprep.subr.mxu0 %v246
    %1613 = vmatpush1.msra.mxu0 %v245
    %1614 = vmatprep.subr.mxu0 %v248
    %1615 = vmatpush1.msra.mxu0 %v247
    %1616 = vmatprep.subr.mxu0 %v250
    %1617 = vmatpush1.msra.mxu0 %v249
    %1618 = vmatprep.subr.mxu0 %v252
    %1619 = vmatpush1.msra.mxu0 %v251
    %1620 = vmatprep.subr.mxu0 0.0
    %1621 = vmatpush1.msra.mxu0 0.0
    %1622 = vmatprep.subr.mxu0 0.0
    %1623 = vmatpush1.msra.mxu0 0.0
    %1624 = vmatprep.subr.mxu0 0.0
    %1625 = vmatpush1.msra.mxu0 0.0
    %1626 = vmatprep.subr.mxu0 0.0
    %1627 = vmatpush1.msra.mxu0 0.0
    %1628 = vmatprep.subr.mxu0 0.0
    %1629 = vmatpush1.msra.mxu0 0.0
    %1630 = vmatprep.subr.mxu0 0.0
    %1631 = vmatpush1.msra.mxu0 0.0
    %1632 = vmatprep.subr.mxu0 0.0
    %1633 = vmatpush1.msra.mxu0 0.0
    %1634 = vmatprep.subr.mxu0 0.0
    %1635 = vmatpush1.msra.mxu0 0.0
    %1636 = vmatprep.subr.mxu0 0.0
    %1637 = vmatpush1.msra.mxu0 0.0
    %1638 = vmatprep.subr.mxu0 0.0
    %1639 = vmatpush1.msra.mxu0 0.0
    %1640 = vmatprep.subr.mxu0 0.0
    %1641 = vmatpush1.msra.mxu0 0.0
    %1642 = vmatprep.subr.mxu0 0.0
    %1643 = vmatpush1.msra.mxu0 0.0
    %1644 = vmatprep.subr.mxu0 0.0
    %1645 = vmatpush1.msra.mxu0 0.0
    %1646 = vmatprep.subr.mxu0 0.0
    %1647 = vmatpush1.msra.mxu0 0.0
    %1648 = vmatprep.subr.mxu0 0.0
    %1649 = vmatpush1.msra.mxu0 0.0
    %1650 = vmatprep.subr.mxu0 0.0
    %1651 = vmatpush1.msra.mxu0 0.0
    %1652 = vmatprep.subr.mxu0 0.0
    %1653 = vmatpush1.msra.mxu0 0.0
    %1654 = vmatprep.subr.mxu0 0.0
    %1655 = vmatpush1.msra.mxu0 0.0
    %1656 = vmatprep.subr.mxu0 0.0
    %1657 = vmatpush1.msra.mxu0 0.0
    %1658 = vmatprep.subr.mxu0 0.0
    %1659 = vmatpush1.msra.mxu0 0.0
    %1660 = vmatprep.subr.mxu0 0.0
    %1661 = vmatpush1.msra.mxu0 0.0
    %1662 = vmatprep.subr.mxu0 0.0
    %1663 = vmatpush1.msra.mxu0 0.0
    %1664 = vmatprep.subr.mxu0 0.0
    %1665 = vmatpush1.msra.mxu0 0.0
    %1666 = vmatprep.subr.mxu0 0.0
    %1667 = vmatpush1.msra.mxu0 0.0
    %1668 = vmatprep.mubr.f32.mxu0 0.0
    %1669 = vmatmul.mubr.f32.gmra.mrb[0].mxu0 %v1602
    %v1670 = vpop.f32.mrb[0].mxu0
    %v1671 = vadd.f32 0.0, %v1670
    %v1672 = vpop.f32.mrb[0].mxu0
    %v1673 = vadd.f32 0.0, %v1672
    %1674 = vdwg.mxu0
    %v1675 = vadd.f32 %v1599, %v1671
    %v1676 = vadd.f32 %v1600, %v1673
    %v1677 = vxor.u32 %v1675, 2147483648
    %v1678 = vxor.u32 %v1676, 2147483648
    %v1679 = vmul.f32 %v1677, 1.442695
    %v1680 = vpow.pop %v1679
    %v1681 = vmul.f32 %v1678, 1.442695
    %v1682 = vpow.pop %v1681
    %v1683 = vadd.f32 %v1680, 1.0
    %v1684 = vadd.f32 %v1682, 1.0
    %v1685 = vrcp.pop %v1683
    %v1686 = vmul.f32 1.0, %v1685
    %v1687 = vrcp.pop %v1684
    %v1688 = vmul.f32 1.0, %v1687
    %v1689 = vtanh.pop %v1676
    %v1690 = vmul.f32 %v1686, %v1483
    %1692 = vrot.lane.b32.xlu0 %v1689, 64
    %v1693 = vpop.permute.xlu0 %1692
    %v1695 = vmul.f32 %v1686, %v1693
    %1697 = vrot.lane.b32.xlu0 %v1695, 64
    %v1698 = vpop.permute.xlu0 %1697
    %v1700 = vadd.f32 %v1690, %v1698
    %v1701 = vtanh.pop %v1700
    %1703 = vrot.lane.b32.xlu0 %v1701, 64
    %v1704 = vpop.permute.xlu0 %1703
    %v1706 = vmul.f32 %v1688, %v1704
    %1708 = vrot.lane.b32.xlu0 %v1595, 64
    %v1709 = vpop.permute.xlu0 %1708
    %v1711 = vsel %vm302, %v1706, %v1709
    %1712 = vmatprep.subr.mxu0 %v254
    %1713 = vmatpush1.msra.mxu0 %v253
    %1714 = vmatprep.subr.mxu0 %v256
    %1715 = vmatpush1.msra.mxu0 %v255
    %1716 = vmatprep.subr.mxu0 %v258
    %1717 = vmatpush1.msra.mxu0 %v257
    %1718 = vmatprep.subr.mxu0 %v260
    %1719 = vmatpush1.msra.mxu0 %v259
    %1720 = vmatprep.subr.mxu0 %v262
    %1721 = vmatpush1.msra.mxu0 %v261
    %1722 = vmatprep.subr.mxu0 %v264
    %1723 = vmatpush1.msra.mxu0 %v263
    %1724 = vmatprep.subr.mxu0 %v266
    %1725 = vmatpush1.msra.mxu0 %v265
    %1726 = vmatprep.subr.mxu0 %v268
    %1727 = vmatpush1.msra.mxu0 %v267
    %1728 = vmatprep.subr.mxu0 %v270
    %1729 = vmatpush1.msra.mxu0 %v269
    %1730 = vmatprep.subr.mxu0 %v272
    %1731 = vmatpush1.msra.mxu0 %v271
    %1732 = vmatprep.subr.mxu0 %v274
    %1733 = vmatpush1.msra.mxu0 %v273
    %1734 = vmatprep.subr.mxu0 %v276
    %1735 = vmatpush1.msra.mxu0 %v275
    %1736 = vmatprep.subr.mxu0 %v278
    %1737 = vmatpush1.msra.mxu0 %v277
    %1738 = vmatprep.subr.mxu0 %v280
    %1739 = vmatpush1.msra.mxu0 %v279
    %1740 = vmatprep.subr.mxu0 %v282
    %1741 = vmatpush1.msra.mxu0 %v281
    %1742 = vmatprep.subr.mxu0 %v284
    %1743 = vmatpush1.msra.mxu0 %v283
    %1744 = vmatprep.subr.mxu0 0.0
    %1745 = vmatpush1.msra.mxu0 0.0
    %1746 = vmatprep.subr.mxu0 0.0
    %1747 = vmatpush1.msra.mxu0 0.0
    %1748 = vmatprep.subr.mxu0 0.0
    %1749 = vmatpush1.msra.mxu0 0.0
    %1750 = vmatprep.subr.mxu0 0.0
    %1751 = vmatpush1.msra.mxu0 0.0
    %1752 = vmatprep.subr.mxu0 0.0
    %1753 = vmatpush1.msra.mxu0 0.0
    %1754 = vmatprep.subr.mxu0 0.0
    %1755 = vmatpush1.msra.mxu0 0.0
    %1756 = vmatprep.subr.mxu0 0.0
    %1757 = vmatpush1.msra.mxu0 0.0
    %1758 = vmatprep.subr.mxu0 0.0
    %1759 = vmatpush1.msra.mxu0 0.0
    %1760 = vmatprep.subr.mxu0 0.0
    %1761 = vmatpush1.msra.mxu0 0.0
    %1762 = vmatprep.subr.mxu0 0.0
    %1763 = vmatpush1.msra.mxu0 0.0
    %1764 = vmatprep.subr.mxu0 0.0
    %1765 = vmatpush1.msra.mxu0 0.0
    %1766 = vmatprep.subr.mxu0 0.0
    %1767 = vmatpush1.msra.mxu0 0.0
    %1768 = vmatprep.subr.mxu0 0.0
    %1769 = vmatpush1.msra.mxu0 0.0
    %1770 = vmatprep.subr.mxu0 0.0
    %1771 = vmatpush1.msra.mxu0 0.0
    %1772 = vmatprep.subr.mxu0 0.0
    %1773 = vmatpush1.msra.mxu0 0.0
    %1774 = vmatprep.subr.mxu0 0.0
    %1775 = vmatpush1.msra.mxu0 0.0
    %1776 = vmatprep.mubr.f32.mxu0 0.0
    %1777 = vmatmul.mubr.f32.gmra.mrb[0].mxu0 %v1711
    %v1778 = vpop.f32.mrb[0].mxu0
    %v1779 = vadd.f32 %v290, %v1778
    %v1780 = vpop.f32.mrb[0].mxu0
    %v1781 = vadd.f32 %v294, %v1780
    %1782 = vdwg.mxu0
    %v1783 = vxor.u32 %v1779, 2147483648
    %v1784 = vxor.u32 %v1781, 2147483648
    %v1785 = vmul.f32 %v1783, 1.442695
    %v1786 = vpow.pop %v1785
    %v1787 = vmul.f32 %v1784, 1.442695
    %v1788 = vpow.pop %v1787
    %v1789 = vadd.f32 %v1786, 1.0
    %v1790 = vadd.f32 %v1788, 1.0
    %v1791 = vrcp.pop %v1789
    %v1792 = vmul.f32 1.0, %v1791
    %v1793 = vrcp.pop %v1790
    %v1794 = vmul.f32 1.0, %v1793
    %v1795 = vtanh.pop %v1781
    %v1796 = vmul.f32 %v1792, %v1589
    %1798 = vrot.lane.b32.xlu0 %v1795, 64
    %v1799 = vpop.permute.xlu0 %1798
    %v1801 = vmul.f32 %v1792, %v1799
    %1803 = vrot.lane.b32.xlu0 %v1801, 64
    %v1804 = vpop.permute.xlu0 %1803
    %v1806 = vadd.f32 %v1796, %v1804
    %v1807 = vtanh.pop %v1806
    %1809 = vrot.lane.b32.xlu0 %v1807, 64
    %v1810 = vpop.permute.xlu0 %1809
    %v1812 = vmul.f32 %v1794, %v1810
    %s1813 = smul.u32 7, 2
    %s1814 = smul.addr %s1813, 8
    %s1815 = scalar_lea.vmem [#allocation2], %s1814
    %v1816 = vld [vmem:[%s1815] sm:$0xff]
    %v1817 = vld [vmem:[%s1815 + $0x8] sm:$0xff]
    %v1819 = vsel %vm302, %v1706, 0
    %1821 = vmatprep.subr.mxu0 %v238
    %1822 = vmatpush1.msra.mxu0 %v237
    %1823 = vmatprep.subr.mxu0 %v240
    %1824 = vmatpush1.msra.mxu0 %v239
    %1825 = vmatprep.subr.mxu0 %v242
    %1826 = vmatpush1.msra.mxu0 %v241
    %1827 = vmatprep.subr.mxu0 %v244
    %1828 = vmatpush1.msra.mxu0 %v243
    %1829 = vmatprep.subr.mxu0 %v246
    %1830 = vmatpush1.msra.mxu0 %v245
    %1831 = vmatprep.subr.mxu0 %v248
    %1832 = vmatpush1.msra.mxu0 %v247
    %1833 = vmatprep.subr.mxu0 %v250
    %1834 = vmatpush1.msra.mxu0 %v249
    %1835 = vmatprep.subr.mxu0 %v252
    %1836 = vmatpush1.msra.mxu0 %v251
    %1837 = vmatprep.subr.mxu0 0.0
    %1838 = vmatpush1.msra.mxu0 0.0
    %1839 = vmatprep.subr.mxu0 0.0
    %1840 = vmatpush1.msra.mxu0 0.0
    %1841 = vmatprep.subr.mxu0 0.0
    %1842 = vmatpush1.msra.mxu0 0.0
    %1843 = vmatprep.subr.mxu0 0.0
    %1844 = vmatpush1.msra.mxu0 0.0
    %1845 = vmatprep.subr.mxu0 0.0
    %1846 = vmatpush1.msra.mxu0 0.0
    %1847 = vmatprep.subr.mxu0 0.0
    %1848 = vmatpush1.msra.mxu0 0.0
    %1849 = vmatprep.subr.mxu0 0.0
    %1850 = vmatpush1.msra.mxu0 0.0
    %1851 = vmatprep.subr.mxu0 0.0
    %1852 = vmatpush1.msra.mxu0 0.0
    %1853 = vmatprep.subr.mxu0 0.0
    %1854 = vmatpush1.msra.mxu0 0.0
    %1855 = vmatprep.subr.mxu0 0.0
    %1856 = vmatpush1.msra.mxu0 0.0
    %1857 = vmatprep.subr.mxu0 0.0
    %1858 = vmatpush1.msra.mxu0 0.0
    %1859 = vmatprep.subr.mxu0 0.0
    %1860 = vmatpush1.msra.mxu0 0.0
    %1861 = vmatprep.subr.mxu0 0.0
    %1862 = vmatpush1.msra.mxu0 0.0
    %1863 = vmatprep.subr.mxu0 0.0
    %1864 = vmatpush1.msra.mxu0 0.0
    %1865 = vmatprep.subr.mxu0 0.0
    %1866 = vmatpush1.msra.mxu0 0.0
    %1867 = vmatprep.subr.mxu0 0.0
    %1868 = vmatpush1.msra.mxu0 0.0
    %1869 = vmatprep.subr.mxu0 0.0
    %1870 = vmatpush1.msra.mxu0 0.0
    %1871 = vmatprep.subr.mxu0 0.0
    %1872 = vmatpush1.msra.mxu0 0.0
    %1873 = vmatprep.subr.mxu0 0.0
    %1874 = vmatpush1.msra.mxu0 0.0
    %1875 = vmatprep.subr.mxu0 0.0
    %1876 = vmatpush1.msra.mxu0 0.0
    %1877 = vmatprep.subr.mxu0 0.0
    %1878 = vmatpush1.msra.mxu0 0.0
    %1879 = vmatprep.subr.mxu0 0.0
    %1880 = vmatpush1.msra.mxu0 0.0
    %1881 = vmatprep.subr.mxu0 0.0
    %1882 = vmatpush1.msra.mxu0 0.0
    %1883 = vmatprep.subr.mxu0 0.0
    %1884 = vmatpush1.msra.mxu0 0.0
    %1885 = vmatprep.mubr.f32.mxu0 0.0
    %1886 = vmatmul.mubr.f32.gmra.mrb[0].mxu0 %v1819
    %v1887 = vpop.f32.mrb[0].mxu0
    %v1888 = vadd.f32 0.0, %v1887
    %v1889 = vpop.f32.mrb[0].mxu0
    %v1890 = vadd.f32 0.0, %v1889
    %1891 = vdwg.mxu0
    %v1892 = vadd.f32 %v1816, %v1888
    %v1893 = vadd.f32 %v1817, %v1890
    %v1894 = vxor.u32 %v1892, 2147483648
    %v1895 = vxor.u32 %v1893, 2147483648
    %v1896 = vmul.f32 %v1894, 1.442695
    %v1897 = vpow.pop %v1896
    %v1898 = vmul.f32 %v1895, 1.442695
    %v1899 = vpow.pop %v1898
    %v1900 = vadd.f32 %v1897, 1.0
    %v1901 = vadd.f32 %v1899, 1.0
    %v1902 = vrcp.pop %v1900
    %v1903 = vmul.f32 1.0, %v1902
    %v1904 = vrcp.pop %v1901
    %v1905 = vmul.f32 1.0, %v1904
    %v1906 = vtanh.pop %v1893
    %v1907 = vmul.f32 %v1903, %v1700
    %1909 = vrot.lane.b32.xlu0 %v1906, 64
    %v1910 = vpop.permute.xlu0 %1909
    %v1912 = vmul.f32 %v1903, %v1910
    %1914 = vrot.lane.b32.xlu0 %v1912, 64
    %v1915 = vpop.permute.xlu0 %1914
    %v1917 = vadd.f32 %v1907, %v1915
    %v1918 = vtanh.pop %v1917
    %1920 = vrot.lane.b32.xlu0 %v1918, 64
    %v1921 = vpop.permute.xlu0 %1920
    %v1923 = vmul.f32 %v1905, %v1921
    %1925 = vrot.lane.b32.xlu0 %v1812, 64
    %v1926 = vpop.permute.xlu0 %1925
    %v1928 = vsel %vm302, %v1923, %v1926
    %1929 = vmatprep.subr.mxu0 %v254
    %1930 = vmatpush1.msra.mxu0 %v253
    %1931 = vmatprep.subr.mxu0 %v256
    %1932 = vmatpush1.msra.mxu0 %v255
    %1933 = vmatprep.subr.mxu0 %v258
    %1934 = vmatpush1.msra.mxu0 %v257
    %1935 = vmatprep.subr.mxu0 %v260
    %1936 = vmatpush1.msra.mxu0 %v259
    %1937 = vmatprep.subr.mxu0 %v262
    %1938 = vmatpush1.msra.mxu0 %v261
    %1939 = vmatprep.subr.mxu0 %v264
    %1940 = vmatpush1.msra.mxu0 %v263
    %1941 = vmatprep.subr.mxu0 %v266
    %1942 = vmatpush1.msra.mxu0 %v265
    %1943 = vmatprep.subr.mxu0 %v268
    %1944 = vmatpush1.msra.mxu0 %v267
    %1945 = vmatprep.subr.mxu0 %v270
    %1946 = vmatpush1.msra.mxu0 %v269
    %1947 = vmatprep.subr.mxu0 %v272
    %1948 = vmatpush1.msra.mxu0 %v271
    %1949 = vmatprep.subr.mxu0 %v274
    %1950 = vmatpush1.msra.mxu0 %v273
    %1951 = vmatprep.subr.mxu0 %v276
    %1952 = vmatpush1.msra.mxu0 %v275
    %1953 = vmatprep.subr.mxu0 %v278
    %1954 = vmatpush1.msra.mxu0 %v277
    %1955 = vmatprep.subr.mxu0 %v280
    %1956 = vmatpush1.msra.mxu0 %v279
    %1957 = vmatprep.subr.mxu0 %v282
    %1958 = vmatpush1.msra.mxu0 %v281
    %1959 = vmatprep.subr.mxu0 %v284
    %1960 = vmatpush1.msra.mxu0 %v283
    %1961 = vmatprep.subr.mxu0 0.0
    %1962 = vmatpush1.msra.mxu0 0.0
    %1963 = vmatprep.subr.mxu0 0.0
    %1964 = vmatpush1.msra.mxu0 0.0
    %1965 = vmatprep.subr.mxu0 0.0
    %1966 = vmatpush1.msra.mxu0 0.0
    %1967 = vmatprep.subr.mxu0 0.0
    %1968 = vmatpush1.msra.mxu0 0.0
    %1969 = vmatprep.subr.mxu0 0.0
    %1970 = vmatpush1.msra.mxu0 0.0
    %1971 = vmatprep.subr.mxu0 0.0
    %1972 = vmatpush1.msra.mxu0 0.0
    %1973 = vmatprep.subr.mxu0 0.0
    %1974 = vmatpush1.msra.mxu0 0.0
    %1975 = vmatprep.subr.mxu0 0.0
    %1976 = vmatpush1.msra.mxu0 0.0
    %1977 = vmatprep.subr.mxu0 0.0
    %1978 = vmatpush1.msra.mxu0 0.0
    %1979 = vmatprep.subr.mxu0 0.0
    %1980 = vmatpush1.msra.mxu0 0.0
    %1981 = vmatprep.subr.mxu0 0.0
    %1982 = vmatpush1.msra.mxu0 0.0
    %1983 = vmatprep.subr.mxu0 0.0
    %1984 = vmatpush1.msra.mxu0 0.0
    %1985 = vmatprep.subr.mxu0 0.0
    %1986 = vmatpush1.msra.mxu0 0.0
    %1987 = vmatprep.subr.mxu0 0.0
    %1988 = vmatpush1.msra.mxu0 0.0
    %1989 = vmatprep.subr.mxu0 0.0
    %1990 = vmatpush1.msra.mxu0 0.0
    %1991 = vmatprep.subr.mxu0 0.0
    %1992 = vmatpush1.msra.mxu0 0.0
    %1993 = vmatprep.mubr.f32.mxu0 0.0
    %1994 = vmatmul.mubr.f32.gmra.mrb[0].mxu0 %v1928
    %v1995 = vpop.f32.mrb[0].mxu0
    %v1996 = vadd.f32 %v290, %v1995
    %v1997 = vpop.f32.mrb[0].mxu0
    %v1998 = vadd.f32 %v294, %v1997
    %1999 = vdwg.mxu0
    %v2000 = vxor.u32 %v1996, 2147483648
    %v2001 = vxor.u32 %v1998, 2147483648
    %v2002 = vmul.f32 %v2000, 1.442695
    %v2003 = vpow.pop %v2002
    %v2004 = vmul.f32 %v2001, 1.442695
    %v2005 = vpow.pop %v2004
    %v2006 = vadd.f32 %v2003, 1.0
    %v2007 = vadd.f32 %v2005, 1.0
    %v2008 = vrcp.pop %v2006
    %v2009 = vmul.f32 1.0, %v2008
    %v2010 = vrcp.pop %v2007
    %v2011 = vmul.f32 1.0, %v2010
    %v2012 = vtanh.pop %v1998
    %v2013 = vmul.f32 %v2009, %v1806
    %2015 = vrot.lane.b32.xlu0 %v2012, 64
    %v2016 = vpop.permute.xlu0 %2015
    %v2018 = vmul.f32 %v2009, %v2016
    %2020 = vrot.lane.b32.xlu0 %v2018, 64
    %v2021 = vpop.permute.xlu0 %2020
    %v2023 = vadd.f32 %v2013, %v2021
    %v2024 = vtanh.pop %v2023
    %2026 = vrot.lane.b32.xlu0 %v2024, 64
    %v2027 = vpop.permute.xlu0 %2026
    %v2029 = vmul.f32 %v2011, %v2027
    %2030 = vst.msk [vmem:[#allocation8] sm:$0xff] %vm302, %v2029
    // Predicated region
    $region34: #{tpu_custom_call.1} parent=1 // pred_check
      _
    $region35: #{tpu_custom_call.1} parent=1 // pred_check_branch
      %2032 = sbr.rel (0) target = $region37
    $region36: #{tpu_custom_call.1} parent=1 // pred_region
      %s2034 = ssub.s32 128, 128
      %2035 = vsyncadd [#allocation5], %s2034
      %s2037 = sshll.u32 [#allocation8], 4
      %s2038 = int_to_ptr.vmem [resolvable:$true] %s2037
      %2040 = dma.vmem_to_hbm [thread:$0]  %s2038, 128, %s6, [#allocation5]
    $region37: #{tpu_custom_call.1} parent=1 // pred_fallthru
      _
    // Predicated region
    $region38: #{tpu_custom_call.1} parent=1 // pred_check
      _
    $region39: #{tpu_custom_call.1} parent=1 // pred_check_branch
      %2042 = sbr.rel (0) target = $region41
    $region40: #{tpu_custom_call.1} parent=1 // pred_region
      %2043 = dma.done [#allocation5], 128
    $region41: #{tpu_custom_call.1} parent=1 // pred_fallthru
      _
    %2044 = vsyncpa [#allocation4], 1
    %2045 = vsyncpa [#allocation7], 1
    %2046 = vsyncpa [#allocation5], 1

</llo_original>
